<compile_context>
chip_gen: v5e
topology: v5e:2x2
jax: 0.10.0
libtpu: 0.0.40
codegen_flags: <defaults>
</compile_context>

<pallas_src>
import math

import jax
import jax.numpy as jnp
from jax.experimental import pallas as pl
from jax.experimental.pallas import tpu as pltpu

# ---------------- model hyper-parameters (small, consistent with the module) ----
VOCAB = 50
VOCAB_PAD = 64    # embedding table padded to a sublane-aligned row count
EMB = 32          # embedding_dim
HID = 64          # hidden_dim == dim_feedforward
NHEAD = 4
HEAD_DIM = EMB // NHEAD
B = 2
T = 8
BT = B * T
LN_EPS = 1e-5


# ---------------- Pallas kernel: embed + PE + encoder layer + last-step gather ---
def encoder_kernel(lens_ref,                    # SMEM scalar prefetch: (B,) int32
                   tok_ref,                     # (BT, 1) int32 token ids (flattened)
                   pe_ref,                      # (BT, E) masked positional encoding
                   emb_ref,                     # (VOCAB_PAD, E) embedding table
                   wqkv_ref, bqkv_ref,          # (E, 3E), (1, 3E)   (pre-transposed W)
                   wo_ref, bo_ref,              # (E, E),  (1, E)
                   ln1w_ref, ln1b_ref,          # (1, E), (1, E)
                   w1_ref, b1_ref,              # (E, HID), (1, HID)
                   w2_ref, b2_ref,              # (HID, E), (1, E)
                   ln2w_ref, ln2b_ref,          # (1, E), (1, E)
                   out_ref,                     # (B, E)
                   y_scr):                      # VMEM scratch (BT, E) f32
    f32 = jnp.float32

    # ---- fused embedding lookup (one-hot matmul) + positional encoding --------
    tok = tok_ref[...]                                                  # (BT, 1)
    onehot = (jax.lax.broadcasted_iota(jnp.int32, (BT, VOCAB_PAD), 1)
              == tok).astype(f32)                                       # (BT, VOCAB_PAD)
    x = jnp.dot(onehot, emb_ref[...], preferred_element_type=f32) + pe_ref[...]  # (BT, E)

    # ---- QKV projection over the folded batch (single MXU matmul) -------------
    qkv = jnp.dot(x, wqkv_ref[...], preferred_element_type=f32) + bqkv_ref[...]  # (BT, 3E)
    q = qkv[:, :EMB].reshape(B, T, EMB)
    k = qkv[:, EMB:2 * EMB].reshape(B, T, EMB)
    v = qkv[:, 2 * EMB:].reshape(B, T, EMB)

    # ---- multi-head self attention: batched over B, single merged softmax -----
    scale = 1.0 / math.sqrt(HEAD_DIM)
    s_heads = []
    for h in range(NHEAD):                                              # static, 4 iters
        sl = slice(h * HEAD_DIM, (h + 1) * HEAD_DIM)
        s_heads.append(jnp.einsum('bqd,bkd->bqk', q[:, :, sl], k[:, :, sl],
                                  preferred_element_type=f32))          # (B, T, T)
    s = jnp.concatenate(s_heads, axis=1) * scale                        # (B, H*T, T)
    s = s - jnp.max(s, axis=-1, keepdims=True)
    p = jnp.exp(s)
    p = p * pl.reciprocal(jnp.sum(p, axis=-1, keepdims=True), approx=True)

    o_heads = []
    for h in range(NHEAD):
        ph = p[:, h * T:(h + 1) * T, :]                                 # (B, T, T)
        vh = v[:, :, h * HEAD_DIM:(h + 1) * HEAD_DIM]                   # (B, T, Dh)
        o_heads.append(jnp.einsum('bqk,bkd->bqd', ph, vh,
                                  preferred_element_type=f32))          # (B, T, Dh)
    attn = jnp.concatenate(o_heads, axis=-1).reshape(BT, EMB)           # (BT, E)
    attn = jnp.dot(attn, wo_ref[...], preferred_element_type=f32) + bo_ref[...]

    # ---- residual + LayerNorm 1 (post-norm) ------------------------------------
    x1 = x + attn
    mu = jnp.mean(x1, axis=-1, keepdims=True)
    var = jnp.mean((x1 - mu) ** 2, axis=-1, keepdims=True)
    x1 = (x1 - mu) * jax.lax.rsqrt(var + LN_EPS) * ln1w_ref[...] + ln1b_ref[...]

    # ---- feed-forward (linear -> relu -> linear) -------------------------------
    h1 = jnp.dot(x1, w1_ref[...], preferred_element_type=f32) + b1_ref[...]
    h1 = jnp.maximum(h1, 0.0)
    h2 = jnp.dot(h1, w2_ref[...], preferred_element_type=f32) + b2_ref[...]

    # ---- residual + LayerNorm 2 -------------------------------------------------
    x2 = x1 + h2
    mu = jnp.mean(x2, axis=-1, keepdims=True)
    var = jnp.mean((x2 - mu) ** 2, axis=-1, keepdims=True)
    y = (x2 - mu) * jax.lax.rsqrt(var + LN_EPS) * ln2w_ref[...] + ln2b_ref[...]  # (BT, E)

    # ---- last valid timestep gather: dynamic row reads, one full-block store ---
    y_scr[...] = y
    rows = []
    for b in range(B):                                                  # static, B iters
        idx = b * T + jnp.maximum(lens_ref[b] - 1, 0)                   # clamp: empty-seq safe
        rows.append(y_scr[pl.ds(idx, 1), :])                            # (1, E)
    out_ref[...] = jnp.concatenate(rows, axis=0)                        # (B, E)


def transformer_encoder_forward(tokens, sent_lens, params):
    """tokens: (B, T) int32 padded ids (0 = pad); sent_lens: (B,) int32."""
    tok_flat = tokens.reshape(BT, 1).astype(jnp.int32)

    # sinusoidal positional encoding, masked so it is added only to valid steps
    pos = jnp.arange(T, dtype=jnp.float32)[:, None]
    div = jnp.exp(jnp.arange(0, EMB, 2, dtype=jnp.float32) * (-math.log(10000.0) / EMB))
    pe = jnp.zeros((T, EMB), jnp.float32)
    pe = pe.at[:, 0::2].set(jnp.sin(pos * div)).at[:, 1::2].set(jnp.cos(pos * div))
    valid = (jnp.arange(T)[None, :] < sent_lens[:, None]).astype(jnp.float32)    # (B, T)
    pe_masked = (pe[None] * valid[:, :, None]).reshape(BT, EMB)                  # (BT, E)

    # pad embedding table to a sublane-aligned row count (extra rows are zero)
    emb_pad = jnp.zeros((VOCAB_PAD, EMB), jnp.float32).at[:VOCAB].set(params["emb"])

    # pre-transpose all weights once in the wrapper: kernel does plain x @ W
    wqkv_t = params["wqkv"].T        # (E, 3E)
    wo_t = params["wo"].T            # (E, E)
    w1_t = params["w1"].T            # (E, HID)
    w2_t = params["w2"].T            # (HID, E)

    full = lambda shape: pl.BlockSpec(shape, lambda i, lens: (0,) * len(shape))
    grid_spec = pltpu.PrefetchScalarGridSpec(
        num_scalar_prefetch=1,
        grid=(1,),                                       # single step: whole batch at once
        in_specs=[
            full((BT, 1)),                               # tokens (flattened)
            full((BT, EMB)),                             # masked PE
            full((VOCAB_PAD, EMB)),                      # embedding table
            full((EMB, 3 * EMB)), full((1, 3 * EMB)),    # in_proj W^T, b
            full((EMB, EMB)), full((1, EMB)),            # out_proj W^T, b
            full((1, EMB)), full((1, EMB)),              # ln1 w, b
            full((EMB, HID)), full((1, HID)),            # linear1 W^T, b
            full((HID, EMB)), full((1, EMB)),            # linear2 W^T, b
            full((1, EMB)), full((1, EMB)),              # ln2 w, b
        ],
        out_specs=pl.BlockSpec((B, EMB), lambda i, lens: (0, 0)),
        scratch_shapes=[pltpu.VMEM((BT, EMB), jnp.float32)],
    )

    out = pl.pallas_call(
        encoder_kernel,
        out_shape=jax.ShapeDtypeStruct((B, EMB), jnp.float32),
        grid_spec=grid_spec,
        compiler_params=pltpu.CompilerParams(dimension_semantics=("parallel",)),
    )(
        sent_lens.astype(jnp.int32),
        tok_flat, pe_masked, emb_pad,
        wqkv_t, params["bqkv"],
        wo_t, params["bo"],
        params["ln1w"], params["ln1b"],
        w1_t, params["b1"],
        w2_t, params["b2"],
        params["ln2w"], params["ln2b"],
    )
    return out                                           # (B, E)


# ---------------- pure-JAX reference (same math) for sanity checking -------------
def reference_forward(tokens, sent_lens, params):
    emb = jnp.take(params["emb"], tokens, axis=0)
    pos = jnp.arange(T, dtype=jnp.float32)[:, None]
    div = jnp.exp(jnp.arange(0, EMB, 2, dtype=jnp.float32) * (-math.log(10000.0) / EMB))
    pe = jnp.zeros((T, EMB), jnp.float32)
    pe = pe.at[:, 0::2].set(jnp.sin(pos * div)).at[:, 1::2].set(jnp.cos(pos * div))
    valid = (jnp.arange(T)[None, :] < sent_lens[:, None]).astype(jnp.float32)
    x = emb + pe[None] * valid[:, :, None]

    qkv = x @ params["wqkv"].T + params["bqkv"][0]
    q, k, v = qkv[..., :EMB], qkv[..., EMB:2 * EMB], qkv[..., 2 * EMB:]

    def heads(a):  # (B, T, E) -> (B, H, T, Dh)
        return a.reshape(B, T, NHEAD, HEAD_DIM).transpose(0, 2, 1, 3)

    qh, kh, vh = heads(q), heads(k), heads(v)
    s = jnp.einsum("bhqd,bhkd->bhqk", qh, kh) / math.sqrt(HEAD_DIM)
    p = jax.nn.softmax(s, axis=-1)
    a = jnp.einsum("bhqk,bhkd->bhqd", p, vh).transpose(0, 2, 1, 3).reshape(B, T, EMB)
    attn = a @ params["wo"].T + params["bo"][0]

    def ln(z, w, b):
        mu = z.mean(-1, keepdims=True)
        var = ((z - mu) ** 2).mean(-1, keepdims=True)
        return (z - mu) / jnp.sqrt(var + LN_EPS) * w[0] + b[0]

    x1 = ln(x + attn, params["ln1w"], params["ln1b"])
    h = jnp.maximum(x1 @ params["w1"].T + params["b1"][0], 0.0)
    x2 = ln(x1 + h @ params["w2"].T + params["b2"][0], params["ln2w"], params["ln2b"])
    return x2[jnp.arange(B), sent_lens - 1]


# ---------------- deterministic parameter construction ---------------------------
def make_params(key):
    ks = jax.random.split(key, 8)
    emb = 0.1 * jax.random.normal(ks[0], (VOCAB, EMB), jnp.float32)
    emb = emb.at[0].set(0.0)                             # padding_idx=0
    return {
        "emb": emb,
        "wqkv": 0.1 * jax.random.normal(ks[1], (3 * EMB, EMB), jnp.float32),
        "bqkv": 0.1 * jax.random.normal(ks[2], (1, 3 * EMB), jnp.float32),
        "wo": 0.1 * jax.random.normal(ks[3], (EMB, EMB), jnp.float32),
        "bo": 0.1 * jax.random.normal(ks[4], (1, EMB), jnp.float32),
        "ln1w": jnp.ones((1, EMB), jnp.float32),
        "ln1b": jnp.zeros((1, EMB), jnp.float32),
        "w1": 0.1 * jax.random.normal(ks[5], (HID, EMB), jnp.float32),
        "b1": 0.1 * jax.random.normal(ks[6], (1, HID), jnp.float32),
        "w2": 0.1 * jax.random.normal(ks[7], (EMB, HID), jnp.float32),
        "b2": jnp.zeros((1, EMB), jnp.float32),
        "ln2w": jnp.ones((1, EMB), jnp.float32),
        "ln2b": jnp.zeros((1, EMB), jnp.float32),
    }


if __name__ == "__main__":
    key = jax.random.PRNGKey(0)
    pkey, tkey = jax.random.split(key)
    params = make_params(pkey)

    sent_lens = jnp.array([T, 5], dtype=jnp.int32)       # variable-length batch
    tokens = jax.random.randint(tkey, (B, T), 1, VOCAB, dtype=jnp.int32)
    pad_mask = jnp.arange(T)[None, :] < sent_lens[:, None]
    tokens = jnp.where(pad_mask, tokens, 0)              # 0 = padding token

    fwd = jax.jit(transformer_encoder_forward)
    out = jax.block_until_ready(fwd(tokens, sent_lens, params))

    ref = reference_forward(tokens, sent_lens, params)
    assert out.shape == (B, EMB)
    # tolerance slightly looser than before: softmax denominator uses the EUP
    # approximate reciprocal (pl.reciprocal(approx=True)).
    assert jnp.allclose(out, ref, atol=5e-3, rtol=5e-3), (
        f"max abs diff {jnp.max(jnp.abs(out - ref))}")
    print("KERNEL_OK")
</pallas_src>

<mosaic_0001>
module attributes {stable_mosaic.version = 11 : i64} {
  func.func @encoder_kernel(%arg0: i32, %arg1: memref<2xi32, #tpu.memory_space<smem>>, %arg2: memref<16x1xi32, #tpu.memory_space<vmem>>, %arg3: memref<16x32xf32, #tpu.memory_space<vmem>>, %arg4: memref<64x32xf32, #tpu.memory_space<vmem>>, %arg5: memref<32x96xf32, #tpu.memory_space<vmem>>, %arg6: memref<1x96xf32, #tpu.memory_space<vmem>>, %arg7: memref<32x32xf32, #tpu.memory_space<vmem>>, %arg8: memref<1x32xf32, #tpu.memory_space<vmem>>, %arg9: memref<1x32xf32, #tpu.memory_space<vmem>>, %arg10: memref<1x32xf32, #tpu.memory_space<vmem>>, %arg11: memref<32x64xf32, #tpu.memory_space<vmem>>, %arg12: memref<1x64xf32, #tpu.memory_space<vmem>>, %arg13: memref<64x32xf32, #tpu.memory_space<vmem>>, %arg14: memref<1x32xf32, #tpu.memory_space<vmem>>, %arg15: memref<1x32xf32, #tpu.memory_space<vmem>>, %arg16: memref<1x32xf32, #tpu.memory_space<vmem>>, %arg17: memref<2x32xf32, #tpu.memory_space<vmem>>, %arg18: memref<16x32xf32, #tpu.memory_space<vmem>>) attributes {dimension_semantics = [#tpu.dimension_semantics<parallel>], iteration_bounds = array<i64: 1>, scalar_prefetch = 1 : i64, scratch_operands = 1 : i64, tpu.core_type = #tpu.core_type<tc>, window_params = [{pipeline_mode = #tpu.pipeline_mode<synchronous>, transform_indices = @transform_0, window_bounds = array<i64: 16, 1>}, {pipeline_mode = #tpu.pipeline_mode<synchronous>, transform_indices = @transform_1, window_bounds = array<i64: 16, 32>}, {pipeline_mode = #tpu.pipeline_mode<synchronous>, transform_indices = @transform_2, window_bounds = array<i64: 64, 32>}, {pipeline_mode = #tpu.pipeline_mode<synchronous>, transform_indices = @transform_3, window_bounds = array<i64: 32, 96>}, {pipeline_mode = #tpu.pipeline_mode<synchronous>, transform_indices = @transform_4, window_bounds = array<i64: 1, 96>}, {pipeline_mode = #tpu.pipeline_mode<synchronous>, transform_indices = @transform_5, window_bounds = array<i64: 32, 32>}, {pipeline_mode = #tpu.pipeline_mode<synchronous>, transform_indices = @transform_6, window_bounds = array<i64: 1, 32>}, {pipeline_mode = #tpu.pipeline_mode<synchronous>, transform_indices = @transform_7, window_bounds = array<i64: 1, 32>}, {pipeline_mode = #tpu.pipeline_mode<synchronous>, transform_indices = @transform_8, window_bounds = array<i64: 1, 32>}, {pipeline_mode = #tpu.pipeline_mode<synchronous>, transform_indices = @transform_9, window_bounds = array<i64: 32, 64>}, {pipeline_mode = #tpu.pipeline_mode<synchronous>, transform_indices = @transform_10, window_bounds = array<i64: 1, 64>}, {pipeline_mode = #tpu.pipeline_mode<synchronous>, transform_indices = @transform_11, window_bounds = array<i64: 64, 32>}, {pipeline_mode = #tpu.pipeline_mode<synchronous>, transform_indices = @transform_12, window_bounds = array<i64: 1, 32>}, {pipeline_mode = #tpu.pipeline_mode<synchronous>, transform_indices = @transform_13, window_bounds = array<i64: 1, 32>}, {pipeline_mode = #tpu.pipeline_mode<synchronous>, transform_indices = @transform_14, window_bounds = array<i64: 1, 32>}, {pipeline_mode = #tpu.pipeline_mode<synchronous>, transform_indices = @transform_15, window_bounds = array<i64: 2, 32>}]} {
    %c0 = arith.constant 0 : index
    %c0_0 = arith.constant 0 : index
    %0 = vector.load %arg2[%c0, %c0_0] : memref<16x1xi32, #tpu.memory_space<vmem>>, vector<16x1xi32>
    %1 = tpu.iota {dimensions = array<i32: 1>} : vector<16x64xi32>
    %2 = vector.broadcast %0 : vector<16x1xi32> to vector<16x64xi32>
    %3 = arith.cmpi eq, %1, %2 : vector<16x64xi32>
    %4 = arith.extui %3 : vector<16x64xi1> to vector<16x64xi32>
    %5 = arith.sitofp %4 : vector<16x64xi32> to vector<16x64xf32>
    %c0_1 = arith.constant 0 : index
    %c0_2 = arith.constant 0 : index
    %6 = vector.load %arg4[%c0_1, %c0_2] : memref<64x32xf32, #tpu.memory_space<vmem>>, vector<64x32xf32>
    %cst = arith.constant dense<0.000000e+00> : vector<16x32xf32>
    %7 = tpu.matmul %5, %6, %cst {dimension_numbers = #tpu.dot_dimension_numbers<[1], [0], [0], [1], [0, 0, 1, 1], [], []>} : vector<16x64xf32>, vector<64x32xf32>, vector<16x32xf32> -> vector<16x32xf32>
    %c0_3 = arith.constant 0 : index
    %c0_4 = arith.constant 0 : index
    %8 = vector.load %arg3[%c0_3, %c0_4] : memref<16x32xf32, #tpu.memory_space<vmem>>, vector<16x32xf32>
    %9 = arith.addf %7, %8 : vector<16x32xf32>
    %c0_5 = arith.constant 0 : index
    %c0_6 = arith.constant 0 : index
    %10 = vector.load %arg5[%c0_5, %c0_6] : memref<32x96xf32, #tpu.memory_space<vmem>>, vector<32x96xf32>
    %cst_7 = arith.constant dense<0.000000e+00> : vector<16x96xf32>
    %11 = tpu.matmul %9, %10, %cst_7 {dimension_numbers = #tpu.dot_dimension_numbers<[1], [0], [0], [1], [0, 0, 1, 1], [], []>} : vector<16x32xf32>, vector<32x96xf32>, vector<16x96xf32> -> vector<16x96xf32>
    %c0_8 = arith.constant 0 : index
    %c0_9 = arith.constant 0 : index
    %12 = vector.load %arg6[%c0_8, %c0_9] : memref<1x96xf32, #tpu.memory_space<vmem>>, vector<1x96xf32>
    %13 = vector.broadcast %12 : vector<1x96xf32> to vector<16x96xf32>
    %14 = arith.addf %11, %13 : vector<16x96xf32>
    %15 = vector.extract_strided_slice %14 {offsets = [0, 0], sizes = [16, 32], strides = [1, 1]} : vector<16x96xf32> to vector<16x32xf32>
    %16 = vector.shape_cast %15 : vector<16x32xf32> to vector<2x8x32xf32>
    %17 = vector.extract_strided_slice %14 {offsets = [0, 32], sizes = [16, 32], strides = [1, 1]} : vector<16x96xf32> to vector<16x32xf32>
    %18 = vector.shape_cast %17 : vector<16x32xf32> to vector<2x8x32xf32>
    %19 = vector.extract_strided_slice %14 {offsets = [0, 64], sizes = [16, 32], strides = [1, 1]} : vector<16x96xf32> to vector<16x32xf32>
    %20 = vector.shape_cast %19 : vector<16x32xf32> to vector<2x8x32xf32>
    %21 = vector.extract_strided_slice %16 {offsets = [0, 0, 0], sizes = [2, 8, 8], strides = [1, 1, 1]} : vector<2x8x32xf32> to vector<2x8x8xf32>
    %22 = vector.extract_strided_slice %18 {offsets = [0, 0, 0], sizes = [2, 8, 8], strides = [1, 1, 1]} : vector<2x8x32xf32> to vector<2x8x8xf32>
    "tpu.trace_start"() <{level = 10 : i32, message = "bqd,bkd->bqk"}> : () -> ()
    %cst_10 = arith.constant dense<0.000000e+00> : vector<2x8x8xf32>
    %23 = tpu.matmul %21, %22, %cst_10 {dimension_numbers = #tpu.dot_dimension_numbers<[2], [2], [1], [1], [0, 0, 0, 1, 1, 1], [0], [0]>} : vector<2x8x8xf32>, vector<2x8x8xf32>, vector<2x8x8xf32> -> vector<2x8x8xf32>
    "tpu.trace_stop"() : () -> ()
    %24 = vector.extract_strided_slice %16 {offsets = [0, 0, 8], sizes = [2, 8, 8], strides = [1, 1, 1]} : vector<2x8x32xf32> to vector<2x8x8xf32>
    %25 = vector.extract_strided_slice %18 {offsets = [0, 0, 8], sizes = [2, 8, 8], strides = [1, 1, 1]} : vector<2x8x32xf32> to vector<2x8x8xf32>
    "tpu.trace_start"() <{level = 10 : i32, message = "bqd,bkd->bqk"}> : () -> ()
    %cst_11 = arith.constant dense<0.000000e+00> : vector<2x8x8xf32>
    %26 = tpu.matmul %24, %25, %cst_11 {dimension_numbers = #tpu.dot_dimension_numbers<[2], [2], [1], [1], [0, 0, 0, 1, 1, 1], [0], [0]>} : vector<2x8x8xf32>, vector<2x8x8xf32>, vector<2x8x8xf32> -> vector<2x8x8xf32>
    "tpu.trace_stop"() : () -> ()
    %27 = vector.extract_strided_slice %16 {offsets = [0, 0, 16], sizes = [2, 8, 8], strides = [1, 1, 1]} : vector<2x8x32xf32> to vector<2x8x8xf32>
    %28 = vector.extract_strided_slice %18 {offsets = [0, 0, 16], sizes = [2, 8, 8], strides = [1, 1, 1]} : vector<2x8x32xf32> to vector<2x8x8xf32>
    "tpu.trace_start"() <{level = 10 : i32, message = "bqd,bkd->bqk"}> : () -> ()
    %cst_12 = arith.constant dense<0.000000e+00> : vector<2x8x8xf32>
    %29 = tpu.matmul %27, %28, %cst_12 {dimension_numbers = #tpu.dot_dimension_numbers<[2], [2], [1], [1], [0, 0, 0, 1, 1, 1], [0], [0]>} : vector<2x8x8xf32>, vector<2x8x8xf32>, vector<2x8x8xf32> -> vector<2x8x8xf32>
    "tpu.trace_stop"() : () -> ()
    %30 = vector.extract_strided_slice %16 {offsets = [0, 0, 24], sizes = [2, 8, 8], strides = [1, 1, 1]} : vector<2x8x32xf32> to vector<2x8x8xf32>
    %31 = vector.extract_strided_slice %18 {offsets = [0, 0, 24], sizes = [2, 8, 8], strides = [1, 1, 1]} : vector<2x8x32xf32> to vector<2x8x8xf32>
    "tpu.trace_start"() <{level = 10 : i32, message = "bqd,bkd->bqk"}> : () -> ()
    %cst_13 = arith.constant dense<0.000000e+00> : vector<2x8x8xf32>
    %32 = tpu.matmul %30, %31, %cst_13 {dimension_numbers = #tpu.dot_dimension_numbers<[2], [2], [1], [1], [0, 0, 0, 1, 1, 1], [0], [0]>} : vector<2x8x8xf32>, vector<2x8x8xf32>, vector<2x8x8xf32> -> vector<2x8x8xf32>
    "tpu.trace_stop"() : () -> ()
    %33 = tpu.concatenate %23, %26, %29, %32 in 1 : vector<2x8x8xf32>, vector<2x8x8xf32>, vector<2x8x8xf32>, vector<2x8x8xf32> -> vector<2x32x8xf32>
    %cst_14 = arith.constant 0.353553385 : f32
    %34 = vector.broadcast %cst_14 : f32 to vector<2x32x8xf32>
    %35 = arith.mulf %33, %34 : vector<2x32x8xf32>
    %cst_15 = arith.constant dense<0xFF800000> : vector<2x32xf32>
    %36 = vector.multi_reduction <maximumf>, %35, %cst_15 [2] : vector<2x32x8xf32> to vector<2x32xf32>
    %37 = vector.shape_cast %36 : vector<2x32xf32> to vector<2x32x1xf32>
    %38 = vector.broadcast %37 : vector<2x32x1xf32> to vector<2x32x8xf32>
    %39 = arith.subf %35, %38 : vector<2x32x8xf32>
    %40 = math.exp %39 : vector<2x32x8xf32>
    %cst_16 = arith.constant dense<0.000000e+00> : vector<2x32xf32>
    %41 = vector.multi_reduction <add>, %40, %cst_16 [2] : vector<2x32x8xf32> to vector<2x32xf32>
    %42 = vector.shape_cast %41 : vector<2x32xf32> to vector<2x32x1xf32>
    %43 = tpu.reciprocal %42 {approx = true} : vector<2x32x1xf32> -> vector<2x32x1xf32>
    %44 = vector.broadcast %43 : vector<2x32x1xf32> to vector<2x32x8xf32>
    %45 = arith.mulf %40, %44 : vector<2x32x8xf32>
    %46 = vector.extract_strided_slice %45 {offsets = [0, 0, 0], sizes = [2, 8, 8], strides = [1, 1, 1]} : vector<2x32x8xf32> to vector<2x8x8xf32>
    %47 = vector.extract_strided_slice %20 {offsets = [0, 0, 0], sizes = [2, 8, 8], strides = [1, 1, 1]} : vector<2x8x32xf32> to vector<2x8x8xf32>
    "tpu.trace_start"() <{level = 10 : i32, message = "bqk,bkd->bqd"}> : () -> ()
    %cst_17 = arith.constant dense<0.000000e+00> : vector<2x8x8xf32>
    %48 = tpu.matmul %46, %47, %cst_17 {dimension_numbers = #tpu.dot_dimension_numbers<[2], [1], [1], [2], [0, 0, 0, 1, 1, 2], [0], [0]>} : vector<2x8x8xf32>, vector<2x8x8xf32>, vector<2x8x8xf32> -> vector<2x8x8xf32>
    "tpu.trace_stop"() : () -> ()
    %49 = vector.extract_strided_slice %45 {offsets = [0, 8, 0], sizes = [2, 8, 8], strides = [1, 1, 1]} : vector<2x32x8xf32> to vector<2x8x8xf32>
    %50 = vector.extract_strided_slice %20 {offsets = [0, 0, 8], sizes = [2, 8, 8], strides = [1, 1, 1]} : vector<2x8x32xf32> to vector<2x8x8xf32>
    "tpu.trace_start"() <{level = 10 : i32, message = "bqk,bkd->bqd"}> : () -> ()
    %cst_18 = arith.constant dense<0.000000e+00> : vector<2x8x8xf32>
    %51 = tpu.matmul %49, %50, %cst_18 {dimension_numbers = #tpu.dot_dimension_numbers<[2], [1], [1], [2], [0, 0, 0, 1, 1, 2], [0], [0]>} : vector<2x8x8xf32>, vector<2x8x8xf32>, vector<2x8x8xf32> -> vector<2x8x8xf32>
    "tpu.trace_stop"() : () -> ()
    %52 = vector.extract_strided_slice %45 {offsets = [0, 16, 0], sizes = [2, 8, 8], strides = [1, 1, 1]} : vector<2x32x8xf32> to vector<2x8x8xf32>
    %53 = vector.extract_strided_slice %20 {offsets = [0, 0, 16], sizes = [2, 8, 8], strides = [1, 1, 1]} : vector<2x8x32xf32> to vector<2x8x8xf32>
    "tpu.trace_start"() <{level = 10 : i32, message = "bqk,bkd->bqd"}> : () -> ()
    %cst_19 = arith.constant dense<0.000000e+00> : vector<2x8x8xf32>
    %54 = tpu.matmul %52, %53, %cst_19 {dimension_numbers = #tpu.dot_dimension_numbers<[2], [1], [1], [2], [0, 0, 0, 1, 1, 2], [0], [0]>} : vector<2x8x8xf32>, vector<2x8x8xf32>, vector<2x8x8xf32> -> vector<2x8x8xf32>
    "tpu.trace_stop"() : () -> ()
    %55 = vector.extract_strided_slice %45 {offsets = [0, 24, 0], sizes = [2, 8, 8], strides = [1, 1, 1]} : vector<2x32x8xf32> to vector<2x8x8xf32>
    %56 = vector.extract_strided_slice %20 {offsets = [0, 0, 24], sizes = [2, 8, 8], strides = [1, 1, 1]} : vector<2x8x32xf32> to vector<2x8x8xf32>
    "tpu.trace_start"() <{level = 10 : i32, message = "bqk,bkd->bqd"}> : () -> ()
    %cst_20 = arith.constant dense<0.000000e+00> : vector<2x8x8xf32>
    %57 = tpu.matmul %55, %56, %cst_20 {dimension_numbers = #tpu.dot_dimension_numbers<[2], [1], [1], [2], [0, 0, 0, 1, 1, 2], [0], [0]>} : vector<2x8x8xf32>, vector<2x8x8xf32>, vector<2x8x8xf32> -> vector<2x8x8xf32>
    "tpu.trace_stop"() : () -> ()
    %58 = tpu.concatenate %48, %51, %54, %57 in 2 : vector<2x8x8xf32>, vector<2x8x8xf32>, vector<2x8x8xf32>, vector<2x8x8xf32> -> vector<2x8x32xf32>
    %59 = vector.shape_cast %58 : vector<2x8x32xf32> to vector<16x32xf32>
    %c0_21 = arith.constant 0 : index
    %c0_22 = arith.constant 0 : index
    %60 = vector.load %arg7[%c0_21, %c0_22] : memref<32x32xf32, #tpu.memory_space<vmem>>, vector<32x32xf32>
    %cst_23 = arith.constant dense<0.000000e+00> : vector<16x32xf32>
    %61 = tpu.matmul %59, %60, %cst_23 {dimension_numbers = #tpu.dot_dimension_numbers<[1], [0], [0], [1], [0, 0, 1, 1], [], []>} : vector<16x32xf32>, vector<32x32xf32>, vector<16x32xf32> -> vector<16x32xf32>
    %c0_24 = arith.constant 0 : index
    %c0_25 = arith.constant 0 : index
    %62 = vector.load %arg8[%c0_24, %c0_25] : memref<1x32xf32, #tpu.memory_space<vmem>>, vector<1x32xf32>
    %63 = vector.broadcast %62 : vector<1x32xf32> to vector<16x32xf32>
    %64 = arith.addf %61, %63 : vector<16x32xf32>
    %65 = arith.addf %9, %64 : vector<16x32xf32>
    %cst_26 = arith.constant dense<0.000000e+00> : vector<16xf32>
    %66 = vector.multi_reduction <add>, %65, %cst_26 [1] : vector<16x32xf32> to vector<16xf32>
    %67 = vector.shape_cast %66 : vector<16xf32> to vector<16x1xf32>
    %cst_27 = arith.constant 3.200000e+01 : f32
    %68 = vector.broadcast %cst_27 : f32 to vector<16x1xf32>
    %69 = arith.divf %67, %68 : vector<16x1xf32>
    %70 = vector.broadcast %69 : vector<16x1xf32> to vector<16x32xf32>
    %71 = arith.subf %65, %70 : vector<16x32xf32>
    %72 = arith.mulf %71, %71 : vector<16x32xf32>
    %cst_28 = arith.constant dense<0.000000e+00> : vector<16xf32>
    %73 = vector.multi_reduction <add>, %72, %cst_28 [1] : vector<16x32xf32> to vector<16xf32>
    %74 = vector.shape_cast %73 : vector<16xf32> to vector<16x1xf32>
    %cst_29 = arith.constant 3.200000e+01 : f32
    %75 = vector.broadcast %cst_29 : f32 to vector<16x1xf32>
    %76 = arith.divf %74, %75 : vector<16x1xf32>
    %77 = vector.broadcast %69 : vector<16x1xf32> to vector<16x32xf32>
    %78 = arith.subf %65, %77 : vector<16x32xf32>
    %cst_30 = arith.constant 9.99999974E-6 : f32
    %79 = vector.broadcast %cst_30 : f32 to vector<16x1xf32>
    %80 = arith.addf %76, %79 : vector<16x1xf32>
    %81 = math.rsqrt %80 : vector<16x1xf32>
    %82 = vector.broadcast %81 : vector<16x1xf32> to vector<16x32xf32>
    %83 = arith.mulf %78, %82 : vector<16x32xf32>
    %c0_31 = arith.constant 0 : index
    %c0_32 = arith.constant 0 : index
    %84 = vector.load %arg9[%c0_31, %c0_32] : memref<1x32xf32, #tpu.memory_space<vmem>>, vector<1x32xf32>
    %85 = vector.broadcast %84 : vector<1x32xf32> to vector<16x32xf32>
    %86 = arith.mulf %83, %85 : vector<16x32xf32>
    %c0_33 = arith.constant 0 : index
    %c0_34 = arith.constant 0 : index
    %87 = vector.load %arg10[%c0_33, %c0_34] : memref<1x32xf32, #tpu.memory_space<vmem>>, vector<1x32xf32>
    %88 = vector.broadcast %87 : vector<1x32xf32> to vector<16x32xf32>
    %89 = arith.addf %86, %88 : vector<16x32xf32>
    %c0_35 = arith.constant 0 : index
    %c0_36 = arith.constant 0 : index
    %90 = vector.load %arg11[%c0_35, %c0_36] : memref<32x64xf32, #tpu.memory_space<vmem>>, vector<32x64xf32>
    %cst_37 = arith.constant dense<0.000000e+00> : vector<16x64xf32>
    %91 = tpu.matmul %89, %90, %cst_37 {dimension_numbers = #tpu.dot_dimension_numbers<[1], [0], [0], [1], [0, 0, 1, 1], [], []>} : vector<16x32xf32>, vector<32x64xf32>, vector<16x64xf32> -> vector<16x64xf32>
    %c0_38 = arith.constant 0 : index
    %c0_39 = arith.constant 0 : index
    %92 = vector.load %arg12[%c0_38, %c0_39] : memref<1x64xf32, #tpu.memory_space<vmem>>, vector<1x64xf32>
    %93 = vector.broadcast %92 : vector<1x64xf32> to vector<16x64xf32>
    %94 = arith.addf %91, %93 : vector<16x64xf32>
    %cst_40 = arith.constant 0.000000e+00 : f32
    %95 = vector.broadcast %cst_40 : f32 to vector<16x64xf32>
    %96 = arith.maximumf %94, %95 : vector<16x64xf32>
    %c0_41 = arith.constant 0 : index
    %c0_42 = arith.constant 0 : index
    %97 = vector.load %arg13[%c0_41, %c0_42] : memref<64x32xf32, #tpu.memory_space<vmem>>, vector<64x32xf32>
    %cst_43 = arith.constant dense<0.000000e+00> : vector<16x32xf32>
    %98 = tpu.matmul %96, %97, %cst_43 {dimension_numbers = #tpu.dot_dimension_numbers<[1], [0], [0], [1], [0, 0, 1, 1], [], []>} : vector<16x64xf32>, vector<64x32xf32>, vector<16x32xf32> -> vector<16x32xf32>
    %c0_44 = arith.constant 0 : index
    %c0_45 = arith.constant 0 : index
    %99 = vector.load %arg14[%c0_44, %c0_45] : memref<1x32xf32, #tpu.memory_space<vmem>>, vector<1x32xf32>
    %100 = vector.broadcast %99 : vector<1x32xf32> to vector<16x32xf32>
    %101 = arith.addf %98, %100 : vector<16x32xf32>
    %102 = arith.addf %89, %101 : vector<16x32xf32>
    %cst_46 = arith.constant dense<0.000000e+00> : vector<16xf32>
    %103 = vector.multi_reduction <add>, %102, %cst_46 [1] : vector<16x32xf32> to vector<16xf32>
    %104 = vector.shape_cast %103 : vector<16xf32> to vector<16x1xf32>
    %cst_47 = arith.constant 3.200000e+01 : f32
    %105 = vector.broadcast %cst_47 : f32 to vector<16x1xf32>
    %106 = arith.divf %104, %105 : vector<16x1xf32>
    %107 = vector.broadcast %106 : vector<16x1xf32> to vector<16x32xf32>
    %108 = arith.subf %102, %107 : vector<16x32xf32>
    %109 = arith.mulf %108, %108 : vector<16x32xf32>
    %cst_48 = arith.constant dense<0.000000e+00> : vector<16xf32>
    %110 = vector.multi_reduction <add>, %109, %cst_48 [1] : vector<16x32xf32> to vector<16xf32>
    %111 = vector.shape_cast %110 : vector<16xf32> to vector<16x1xf32>
    %cst_49 = arith.constant 3.200000e+01 : f32
    %112 = vector.broadcast %cst_49 : f32 to vector<16x1xf32>
    %113 = arith.divf %111, %112 : vector<16x1xf32>
    %114 = vector.broadcast %106 : vector<16x1xf32> to vector<16x32xf32>
    %115 = arith.subf %102, %114 : vector<16x32xf32>
    %cst_50 = arith.constant 9.99999974E-6 : f32
    %116 = vector.broadcast %cst_50 : f32 to vector<16x1xf32>
    %117 = arith.addf %113, %116 : vector<16x1xf32>
    %118 = math.rsqrt %117 : vector<16x1xf32>
    %119 = vector.broadcast %118 : vector<16x1xf32> to vector<16x32xf32>
    %120 = arith.mulf %115, %119 : vector<16x32xf32>
    %c0_51 = arith.constant 0 : index
    %c0_52 = arith.constant 0 : index
    %121 = vector.load %arg15[%c0_51, %c0_52] : memref<1x32xf32, #tpu.memory_space<vmem>>, vector<1x32xf32>
    %122 = vector.broadcast %121 : vector<1x32xf32> to vector<16x32xf32>
    %123 = arith.mulf %120, %122 : vector<16x32xf32>
    %c0_53 = arith.constant 0 : index
    %c0_54 = arith.constant 0 : index
    %124 = vector.load %arg16[%c0_53, %c0_54] : memref<1x32xf32, #tpu.memory_space<vmem>>, vector<1x32xf32>
    %125 = vector.broadcast %124 : vector<1x32xf32> to vector<16x32xf32>
    %126 = arith.addf %123, %125 : vector<16x32xf32>
    %c0_55 = arith.constant 0 : index
    %c0_56 = arith.constant 0 : index
    %127 = vector.load %arg18[%c0_55, %c0_56] : memref<16x32xf32, #tpu.memory_space<vmem>>, vector<16x32xf32>
    tpu.vector_store %arg18[%c0_55, %c0_56], %126 {strides = array<i32>} : memref<16x32xf32, #tpu.memory_space<vmem>>, vector<16x32xf32>,
    %c0_57 = arith.constant 0 : index
    %128 = memref.load %arg1[%c0_57] : memref<2xi32, #tpu.memory_space<smem>>
    %c1_i32 = arith.constant 1 : i32
    %129 = arith.subi %128, %c1_i32 : i32
    %c0_i32 = arith.constant 0 : i32
    %130 = arith.maxsi %129, %c0_i32 : i32
    %c0_i32_58 = arith.constant 0 : i32
    %131 = arith.addi %c0_i32_58, %130 : i32
    %132 = arith.index_cast %131 : i32 to index
    %c0_59 = arith.constant 0 : index
    %133 = vector.load %arg18[%132, %c0_59] : memref<16x32xf32, #tpu.memory_space<vmem>>, vector<1x32xf32>
    %c1 = arith.constant 1 : index
    %134 = memref.load %arg1[%c1] : memref<2xi32, #tpu.memory_space<smem>>
    %c1_i32_60 = arith.constant 1 : i32
    %135 = arith.subi %134, %c1_i32_60 : i32
    %c0_i32_61 = arith.constant 0 : i32
    %136 = arith.maxsi %135, %c0_i32_61 : i32
    %c8_i32 = arith.constant 8 : i32
    %137 = arith.addi %c8_i32, %136 : i32
    %138 = arith.index_cast %137 : i32 to index
    %c0_62 = arith.constant 0 : index
    %139 = vector.load %arg18[%138, %c0_62] : memref<16x32xf32, #tpu.memory_space<vmem>>, vector<1x32xf32>
    %140 = tpu.concatenate %133, %139 in 0 : vector<1x32xf32>, vector<1x32xf32> -> vector<2x32xf32>
    %c0_63 = arith.constant 0 : index
    %c0_64 = arith.constant 0 : index
    %141 = vector.load %arg17[%c0_63, %c0_64] : memref<2x32xf32, #tpu.memory_space<vmem>>, vector<2x32xf32>
    tpu.vector_store %arg17[%c0_63, %c0_64], %140 {strides = array<i32>} : memref<2x32xf32, #tpu.memory_space<vmem>>, vector<2x32xf32>,
    return
  }
  func.func @transform_0(%arg0: i32, %arg1: memref<2xi32, #tpu.memory_space<smem>>) -> (i32, i32) {
    %c0_i32 = arith.constant 0 : i32
    %c0_i32_0 = arith.constant 0 : i32
    %c0_i32_1 = arith.constant 0 : i32
    return %c0_i32, %c0_i32_0 : i32, i32
  }
  func.func @transform_1(%arg0: i32, %arg1: memref<2xi32, #tpu.memory_space<smem>>) -> (i32, i32) {
    %c0_i32 = arith.constant 0 : i32
    %c0_i32_0 = arith.constant 0 : i32
    %c0_i32_1 = arith.constant 0 : i32
    return %c0_i32, %c0_i32_0 : i32, i32
  }
  func.func @transform_2(%arg0: i32, %arg1: memref<2xi32, #tpu.memory_space<smem>>) -> (i32, i32) {
    %c0_i32 = arith.constant 0 : i32
    %c0_i32_0 = arith.constant 0 : i32
    %c0_i32_1 = arith.constant 0 : i32
    return %c0_i32, %c0_i32_0 : i32, i32
  }
  func.func @transform_3(%arg0: i32, %arg1: memref<2xi32, #tpu.memory_space<smem>>) -> (i32, i32) {
    %c0_i32 = arith.constant 0 : i32
    %c0_i32_0 = arith.constant 0 : i32
    %c0_i32_1 = arith.constant 0 : i32
    return %c0_i32, %c0_i32_0 : i32, i32
  }
  func.func @transform_4(%arg0: i32, %arg1: memref<2xi32, #tpu.memory_space<smem>>) -> (i32, i32) {
    %c0_i32 = arith.constant 0 : i32
    %c0_i32_0 = arith.constant 0 : i32
    %c0_i32_1 = arith.constant 0 : i32
    return %c0_i32, %c0_i32_0 : i32, i32
  }
  func.func @transform_5(%arg0: i32, %arg1: memref<2xi32, #tpu.memory_space<smem>>) -> (i32, i32) {
    %c0_i32 = arith.constant 0 : i32
    %c0_i32_0 = arith.constant 0 : i32
    %c0_i32_1 = arith.constant 0 : i32
    return %c0_i32, %c0_i32_0 : i32, i32
  }
  func.func @transform_6(%arg0: i32, %arg1: memref<2xi32, #tpu.memory_space<smem>>) -> (i32, i32) {
    %c0_i32 = arith.constant 0 : i32
    %c0_i32_0 = arith.constant 0 : i32
    %c0_i32_1 = arith.constant 0 : i32
    return %c0_i32, %c0_i32_0 : i32, i32
  }
  func.func @transform_7(%arg0: i32, %arg1: memref<2xi32, #tpu.memory_space<smem>>) -> (i32, i32) {
    %c0_i32 = arith.constant 0 : i32
    %c0_i32_0 = arith.constant 0 : i32
    %c0_i32_1 = arith.constant 0 : i32
    return %c0_i32, %c0_i32_0 : i32, i32
  }
  func.func @transform_8(%arg0: i32, %arg1: memref<2xi32, #tpu.memory_space<smem>>) -> (i32, i32) {
    %c0_i32 = arith.constant 0 : i32
    %c0_i32_0 = arith.constant 0 : i32
    %c0_i32_1 = arith.constant 0 : i32
    return %c0_i32, %c0_i32_0 : i32, i32
  }
  func.func @transform_9(%arg0: i32, %arg1: memref<2xi32, #tpu.memory_space<smem>>) -> (i32, i32) {
    %c0_i32 = arith.constant 0 : i32
    %c0_i32_0 = arith.constant 0 : i32
    %c0_i32_1 = arith.constant 0 : i32
    return %c0_i32, %c0_i32_0 : i32, i32
  }
  func.func @transform_10(%arg0: i32, %arg1: memref<2xi32, #tpu.memory_space<smem>>) -> (i32, i32) {
    %c0_i32 = arith.constant 0 : i32
    %c0_i32_0 = arith.constant 0 : i32
    %c0_i32_1 = arith.constant 0 : i32
    return %c0_i32, %c0_i32_0 : i32, i32
  }
  func.func @transform_11(%arg0: i32, %arg1: memref<2xi32, #tpu.memory_space<smem>>) -> (i32, i32) {
    %c0_i32 = arith.constant 0 : i32
    %c0_i32_0 = arith.constant 0 : i32
    %c0_i32_1 = arith.constant 0 : i32
    return %c0_i32, %c0_i32_0 : i32, i32
  }
  func.func @transform_12(%arg0: i32, %arg1: memref<2xi32, #tpu.memory_space<smem>>) -> (i32, i32) {
    %c0_i32 = arith.constant 0 : i32
    %c0_i32_0 = arith.constant 0 : i32
    %c0_i32_1 = arith.constant 0 : i32
    return %c0_i32, %c0_i32_0 : i32, i32
  }
  func.func @transform_13(%arg0: i32, %arg1: memref<2xi32, #tpu.memory_space<smem>>) -> (i32, i32) {
    %c0_i32 = arith.constant 0 : i32
    %c0_i32_0 = arith.constant 0 : i32
    %c0_i32_1 = arith.constant 0 : i32
    return %c0_i32, %c0_i32_0 : i32, i32
  }
  func.func @transform_14(%arg0: i32, %arg1: memref<2xi32, #tpu.memory_space<smem>>) -> (i32, i32) {
    %c0_i32 = arith.constant 0 : i32
    %c0_i32_0 = arith.constant 0 : i32
    %c0_i32_1 = arith.constant 0 : i32
    return %c0_i32, %c0_i32_0 : i32, i32
  }
  func.func @transform_15(%arg0: i32, %arg1: memref<2xi32, #tpu.memory_space<smem>>) -> (i32, i32) {
    %c0_i32 = arith.constant 0 : i32
    %c0_i32_0 = arith.constant 0 : i32
    %c0_i32_1 = arith.constant 0 : i32
    return %c0_i32, %c0_i32_0 : i32, i32
  }
}

</mosaic_0001>

<llo_original>
// kernel: transformer_encoder_forward.1
$region0: #{transformer_encoder_forward.1}
  #allocation0 [shape = 'u32[]', space=smem, size = 0x4, offset = 0x4, fixed_abs, tag = 'smem constant byte address 0x4 - core index']
  #allocation1 [shape = 'u32[72,128]{1,0:T(1,128)}', space=vmem, size = 0x9000, scoped, tag = 'internal scratch']
  #allocation2 [shape = 'f32[16,32]{1,0:T(8,128)}', space=vmem, size = 0x2000, scoped, tag = 'scratch operand']
  #allocation3 [shape = 's32[1]{0}', space=sflag, size = 0x4, scoped, tag = 'scoped memory for transformer_encoder_forward.1']
  #allocation4 [shape = 'u8[512]{0}', space=smem, size = 0x200, scoped, tag = 'prefetched SMEM operand 0']
  %s0 = inlined_call_operand.vmem [shape: s32[2], index: 0, kind: input, shape index: {}]
  %s1 = inlined_call_operand.vmem [shape: s32[16,1], index: 1, kind: input, shape index: {}]
  %s2 = inlined_call_operand.vmem [shape: f32[16,32], index: 2, kind: input, shape index: {}]
  %s3 = inlined_call_operand.vmem [shape: f32[64,32], index: 3, kind: input, shape index: {}]
  %s4 = inlined_call_operand.vmem [shape: f32[32,96], index: 4, kind: input, shape index: {}]
  %s5 = inlined_call_operand.vmem [shape: f32[1,96], index: 5, kind: input, shape index: {}]
  %s6 = inlined_call_operand.vmem [shape: f32[32,32], index: 6, kind: input, shape index: {}]
  %s7 = inlined_call_operand.vmem [shape: f32[1,32], index: 7, kind: input, shape index: {}]
  %s8 = inlined_call_operand.vmem [shape: f32[1,32], index: 8, kind: input, shape index: {}]
  %s9 = inlined_call_operand.vmem [shape: f32[1,32], index: 9, kind: input, shape index: {}]
  %s10 = inlined_call_operand.vmem [shape: f32[32,64], index: 10, kind: input, shape index: {}]
  %s11 = inlined_call_operand.vmem [shape: f32[1,64], index: 11, kind: input, shape index: {}]
  %s12 = inlined_call_operand.vmem [shape: f32[64,32], index: 12, kind: input, shape index: {}]
  %s13 = inlined_call_operand.vmem [shape: f32[1,32], index: 13, kind: input, shape index: {}]
  %s14 = inlined_call_operand.vmem [shape: f32[1,32], index: 14, kind: input, shape index: {}]
  %s15 = inlined_call_operand.vmem [shape: f32[1,32], index: 15, kind: input, shape index: {}]
  %s16 = inlined_call_operand.hbm [shape: f32[2,32], index: 16, kind: output, shape index: {}]
  %s17 = sld [smem:[#allocation0]]
  $region70: #{transformer_encoder_forward.1} parent=0
    _
  %s19 = ssub.s32 1, %s17
  %s20 = scalar_select 0, %s19, %s17
  %s22 = sshll.u32 %s0, 4
  %s23 = int_to_ptr.vmem [resolvable:$true] %s22
  %25 = dma.vmem_to_smem %s23, 16, [#allocation4], [#allocation3]
  %27 = dma.done [#allocation3], 16
  %28 = sfence
  $region1: #{transformer_encoder_forward.1} parent=0
    #allocation5 [shape = 'u8[1024]{0}', space=vmem, size = 0x400, scoped, tag = 'output window, operand 0, single buffered']
    #allocation6 [shape = 's32[1]{0}', space=sflag, size = 0x4, scoped, tag = 'scoped memory for transformer_encoder_forward.1']
    %29 = vsyncpa [#allocation6], 0
    // Predicated region
    $region2: #{transformer_encoder_forward.1} parent=1 // pred_check
      _
    $region3: #{transformer_encoder_forward.1} parent=1 // pred_check_branch
      %31 = sbr.rel (0) target = $region5
    $region4: #{transformer_encoder_forward.1} parent=1 // pred_region
      _
    $region5: #{transformer_encoder_forward.1} parent=1 // pred_fallthru
      _
    // Predicated region
    $region6: #{transformer_encoder_forward.1} parent=1 // pred_check
      _
    $region7: #{transformer_encoder_forward.1} parent=1 // pred_check_branch
      %33 = sbr.rel (0) target = $region9
    $region8: #{transformer_encoder_forward.1} parent=1 // pred_region
      _
    $region9: #{transformer_encoder_forward.1} parent=1 // pred_fallthru
      _
    // Predicated region
    $region10: #{transformer_encoder_forward.1} parent=1 // pred_check
      _
    $region11: #{transformer_encoder_forward.1} parent=1 // pred_check_branch
      %35 = sbr.rel (0) target = $region13
    $region12: #{transformer_encoder_forward.1} parent=1 // pred_region
      _
    $region13: #{transformer_encoder_forward.1} parent=1 // pred_fallthru
      _
    // Predicated region
    $region14: #{transformer_encoder_forward.1} parent=1 // pred_check
      _
    $region15: #{transformer_encoder_forward.1} parent=1 // pred_check_branch
      %37 = sbr.rel (0) target = $region17
    $region16: #{transformer_encoder_forward.1} parent=1 // pred_region
      _
    $region17: #{transformer_encoder_forward.1} parent=1 // pred_fallthru
      _
    // Predicated region
    $region18: #{transformer_encoder_forward.1} parent=1 // pred_check
      _
    $region19: #{transformer_encoder_forward.1} parent=1 // pred_check_branch
      %39 = sbr.rel (0) target = $region21
    $region20: #{transformer_encoder_forward.1} parent=1 // pred_region
      _
    $region21: #{transformer_encoder_forward.1} parent=1 // pred_fallthru
      _
    // Predicated region
    $region22: #{transformer_encoder_forward.1} parent=1 // pred_check
      _
    $region23: #{transformer_encoder_forward.1} parent=1 // pred_check_branch
      %41 = sbr.rel (0) target = $region25
    $region24: #{transformer_encoder_forward.1} parent=1 // pred_region
      _
    $region25: #{transformer_encoder_forward.1} parent=1 // pred_fallthru
      _
    // Predicated region
    $region26: #{transformer_encoder_forward.1} parent=1 // pred_check
      _
    $region27: #{transformer_encoder_forward.1} parent=1 // pred_check_branch
      %43 = sbr.rel (0) target = $region29
    $region28: #{transformer_encoder_forward.1} parent=1 // pred_region
      _
    $region29: #{transformer_encoder_forward.1} parent=1 // pred_fallthru
      _
    // Predicated region
    $region30: #{transformer_encoder_forward.1} parent=1 // pred_check
      _
    $region31: #{transformer_encoder_forward.1} parent=1 // pred_check_branch
      %45 = sbr.rel (0) target = $region33
    $region32: #{transformer_encoder_forward.1} parent=1 // pred_region
      _
    $region33: #{transformer_encoder_forward.1} parent=1 // pred_fallthru
      _
    // Predicated region
    $region34: #{transformer_encoder_forward.1} parent=1 // pred_check
      _
    $region35: #{transformer_encoder_forward.1} parent=1 // pred_check_branch
      %47 = sbr.rel (0) target = $region37
    $region36: #{transformer_encoder_forward.1} parent=1 // pred_region
      _
    $region37: #{transformer_encoder_forward.1} parent=1 // pred_fallthru
      _
    // Predicated region
    $region38: #{transformer_encoder_forward.1} parent=1 // pred_check
      _
    $region39: #{transformer_encoder_forward.1} parent=1 // pred_check_branch
      %49 = sbr.rel (0) target = $region41
    $region40: #{transformer_encoder_forward.1} parent=1 // pred_region
      _
    $region41: #{transformer_encoder_forward.1} parent=1 // pred_fallthru
      _
    // Predicated region
    $region42: #{transformer_encoder_forward.1} parent=1 // pred_check
      _
    $region43: #{transformer_encoder_forward.1} parent=1 // pred_check_branch
      %51 = sbr.rel (0) target = $region45
    $region44: #{transformer_encoder_forward.1} parent=1 // pred_region
      _
    $region45: #{transformer_encoder_forward.1} parent=1 // pred_fallthru
      _
    // Predicated region
    $region46: #{transformer_encoder_forward.1} parent=1 // pred_check
      _
    $region47: #{transformer_encoder_forward.1} parent=1 // pred_check_branch
      %53 = sbr.rel (0) target = $region49
    $region48: #{transformer_encoder_forward.1} parent=1 // pred_region
      _
    $region49: #{transformer_encoder_forward.1} parent=1 // pred_fallthru
      _
    // Predicated region
    $region50: #{transformer_encoder_forward.1} parent=1 // pred_check
      _
    $region51: #{transformer_encoder_forward.1} parent=1 // pred_check_branch
      %55 = sbr.rel (0) target = $region53
    $region52: #{transformer_encoder_forward.1} parent=1 // pred_region
      _
    $region53: #{transformer_encoder_forward.1} parent=1 // pred_fallthru
      _
    // Predicated region
    $region54: #{transformer_encoder_forward.1} parent=1 // pred_check
      _
    $region55: #{transformer_encoder_forward.1} parent=1 // pred_check_branch
      %57 = sbr.rel (0) target = $region57
    $region56: #{transformer_encoder_forward.1} parent=1 // pred_region
      _
    $region57: #{transformer_encoder_forward.1} parent=1 // pred_fallthru
      _
    // Predicated region
    $region58: #{transformer_encoder_forward.1} parent=1 // pred_check
      _
    $region59: #{transformer_encoder_forward.1} parent=1 // pred_check_branch
      %59 = sbr.rel (0) target = $region61
    $region60: #{transformer_encoder_forward.1} parent=1 // pred_region
      _
    $region61: #{transformer_encoder_forward.1} parent=1 // pred_fallthru
      _
    %v60 = vld [vmem:[%s1] sm:$0xff]
    %v61 = vld [vmem:[%s1 + $0x8] sm:$0xff]
    %v62 = vlaneseq
    %v63 = vand.u32 %v62, 127
    %64 = vset.pattern.permute.xlu0 0
    %65 = vperm.xlu0 %64, %v60
    %v66 = vpop.permute.xlu0 %65
    %67 = vset.pattern.permute.xlu0 0
    %68 = vperm.xlu0 %67, %v61
    %v69 = vpop.permute.xlu0 %68
    %vm70 = vcmp.eq.s32.totalorder %v63, %v66
    %vm71 = vcmp.eq.s32.totalorder %v63, %v69
    %v72 = vsel %vm70, 1, 0
    %v73 = vsel %vm71, 1, 0
    %v74 = vcvt.s32.f32 %v72
    %v75 = vcvt.s32.f32 %v73
    %v76 = vld [vmem:[%s3] sm:$0xff]
    %v77 = vld [vmem:[%s3 + $0x8] sm:$0xff]
    %v78 = vld [vmem:[%s3 + $0x10] sm:$0xff]
    %v79 = vld [vmem:[%s3 + $0x18] sm:$0xff]
    %v80 = vld [vmem:[%s3 + $0x20] sm:$0xff]
    %v81 = vld [vmem:[%s3 + $0x28] sm:$0xff]
    %v82 = vld [vmem:[%s3 + $0x30] sm:$0xff]
    %v83 = vld [vmem:[%s3 + $0x38] sm:$0xff]
    %v84 = vld [vmem:[%s2] sm:$0xff]
    %v85 = vld [vmem:[%s2 + $0x8] sm:$0xff]
    %vm86 = vcmask 523264
    %v88 = vsel %vm86, %v74, 0
    %v91 = vsel %vm86, %v75, 0
    %93 = vmatpush.msra.mxu0 0.0
    %94 = vmatpush.msra.mxu0 0.0
    %95 = vmatpush.msra.mxu0 0.0
    %96 = vmatpush.msra.mxu0 0.0
    %97 = vmatpush.msra.mxu0 0.0
    %98 = vmatpush.msra.mxu0 0.0
    %99 = vmatpush.msra.mxu0 0.0
    %100 = vmatpush.msra.mxu0 0.0
    %101 = vmatpush.msra.mxu0 %v83
    %102 = vmatpush.msra.mxu0 %v82
    %103 = vmatpush.msra.mxu0 %v81
    %104 = vmatpush.msra.mxu0 %v80
    %105 = vmatpush.msra.mxu0 %v79
    %106 = vmatpush.msra.mxu0 %v78
    %107 = vmatpush.msra.mxu0 %v77
    %108 = vmatpush.msra.mxu0 %v76
    %109 = vmatmul.f32.gmra.mxu0 %v88
    %v110 = vpop.f32.mrf.mxu0
    %v111 = vadd.f32 %v84, %v110
    %112 = vmatmul.f32.gmra.mxu0 %v91
    %v113 = vpop.f32.mrf.mxu0
    %v114 = vadd.f32 %v85, %v113
    %115 = vdwg.mxu0
    %v116 = vld [vmem:[%s4] sm:$0xff]
    %v117 = vld [vmem:[%s4 + $0x8] sm:$0xff]
    %v118 = vld [vmem:[%s4 + $0x10] sm:$0xff]
    %v119 = vld [vmem:[%s4 + $0x18] sm:$0xff]
    %v120 = vld [vmem:[%s5] sm:$0x1]
    %v122 = vperm.slane %v120, 0
    %vm124 = vcmask 261120
    %v126 = vsel %vm124, %v111, 0
    %v129 = vsel %vm124, %v114, 0
    %131 = vmatpush.msra.mxu0 0.0
    %132 = vmatpush.msra.mxu0 0.0
    %133 = vmatpush.msra.mxu0 0.0
    %134 = vmatpush.msra.mxu0 0.0
    %135 = vmatpush.msra.mxu0 0.0
    %136 = vmatpush.msra.mxu0 0.0
    %137 = vmatpush.msra.mxu0 0.0
    %138 = vmatpush.msra.mxu0 0.0
    %139 = vmatpush.msra.mxu0 0.0
    %140 = vmatpush.msra.mxu0 0.0
    %141 = vmatpush.msra.mxu0 0.0
    %142 = vmatpush.msra.mxu0 0.0
    %143 = vmatpush.msra.mxu0 %v119
    %144 = vmatpush.msra.mxu0 %v118
    %145 = vmatpush.msra.mxu0 %v117
    %146 = vmatpush.msra.mxu0 %v116
    %147 = vmatmul.f32.gmra.mxu0 %v126
    %v148 = vpop.f32.mrf.mxu0
    %v149 = vadd.f32 %v122, %v148
    %150 = vmatmul.f32.gmra.mxu0 %v129
    %v151 = vpop.f32.mrf.mxu0
    %v152 = vadd.f32 %v122, %v151
    %153 = vdwg.mxu0
    %155 = vrot.lane.b32.xlu0 %v149, 96
    %v156 = vpop.permute.xlu0 %155
    %vm157 = vcmask 64512
    %v158 = vsel %vm157, %v149, 0
    %v160 = vsel %vm157, %v156, 0
    %162 = vmatpush.xpose.msra.mxu0 0.0
    %163 = vmatpush.xpose.msra.mxu0 0.0
    %164 = vmatpush.xpose.msra.mxu0 0.0
    %165 = vmatpush.xpose.msra.mxu0 0.0
    %166 = vmatpush.xpose.msra.mxu0 0.0
    %167 = vmatpush.xpose.msra.mxu0 0.0
    %168 = vmatpush.xpose.msra.mxu0 0.0
    %169 = vmatpush.xpose.msra.mxu0 0.0
    %170 = vmatpush.xpose.msra.mxu0 0.0
    %171 = vmatpush.xpose.msra.mxu0 0.0
    %172 = vmatpush.xpose.msra.mxu0 0.0
    %173 = vmatpush.xpose.msra.mxu0 0.0
    %174 = vmatpush.xpose.msra.mxu0 0.0
    %175 = vmatpush.xpose.msra.mxu0 0.0
    %176 = vmatpush.xpose.msra.mxu0 0.0
    %177 = vmatpush.xpose.msra.mxu0 %v160
    %178 = vmatmul.f32.gmra.mxu0 %v158
    %v179 = vpop.f32.mrf.mxu0
    %v180 = vadd.f32 0.0, %v179
    %181 = vdwg.mxu0
    %183 = vrot.lane.b32.xlu0 %v152, 96
    %v184 = vpop.permute.xlu0 %183
    %v185 = vsel %vm157, %v152, 0
    %v187 = vsel %vm157, %v184, 0
    %189 = vmatpush.xpose.msra.mxu0 0.0
    %190 = vmatpush.xpose.msra.mxu0 0.0
    %191 = vmatpush.xpose.msra.mxu0 0.0
    %192 = vmatpush.xpose.msra.mxu0 0.0
    %193 = vmatpush.xpose.msra.mxu0 0.0
    %194 = vmatpush.xpose.msra.mxu0 0.0
    %195 = vmatpush.xpose.msra.mxu0 0.0
    %196 = vmatpush.xpose.msra.mxu0 0.0
    %197 = vmatpush.xpose.msra.mxu0 0.0
    %198 = vmatpush.xpose.msra.mxu0 0.0
    %199 = vmatpush.xpose.msra.mxu0 0.0
    %200 = vmatpush.xpose.msra.mxu0 0.0
    %201 = vmatpush.xpose.msra.mxu0 0.0
    %202 = vmatpush.xpose.msra.mxu0 0.0
    %203 = vmatpush.xpose.msra.mxu0 0.0
    %204 = vmatpush.xpose.msra.mxu0 %v187
    %205 = vmatmul.f32.gmra.mxu0 %v185
    %v206 = vpop.f32.mrf.mxu0
    %v207 = vadd.f32 0.0, %v206
    %208 = vdwg.mxu0
    %209 = vrot.lane.b32.xlu0 %v149, 120
    %v210 = vpop.permute.xlu0 %209
    %211 = vrot.lane.b32.xlu0 %v149, 88
    %v212 = vpop.permute.xlu0 %211
    %v213 = vsel %vm157, %v210, 0
    %v215 = vsel %vm157, %v212, 0
    %217 = vmatpush.xpose.msra.mxu0 0.0
    %218 = vmatpush.xpose.msra.mxu0 0.0
    %219 = vmatpush.xpose.msra.mxu0 0.0
    %220 = vmatpush.xpose.msra.mxu0 0.0
    %221 = vmatpush.xpose.msra.mxu0 0.0
    %222 = vmatpush.xpose.msra.mxu0 0.0
    %223 = vmatpush.xpose.msra.mxu0 0.0
    %224 = vmatpush.xpose.msra.mxu0 0.0
    %225 = vmatpush.xpose.msra.mxu0 0.0
    %226 = vmatpush.xpose.msra.mxu0 0.0
    %227 = vmatpush.xpose.msra.mxu0 0.0
    %228 = vmatpush.xpose.msra.mxu0 0.0
    %229 = vmatpush.xpose.msra.mxu0 0.0
    %230 = vmatpush.xpose.msra.mxu0 0.0
    %231 = vmatpush.xpose.msra.mxu0 0.0
    %232 = vmatpush.xpose.msra.mxu0 %v215
    %233 = vmatmul.f32.gmra.mxu0 %v213
    %v234 = vpop.f32.mrf.mxu0
    %v235 = vadd.f32 0.0, %v234
    %236 = vdwg.mxu0
    %237 = vrot.lane.b32.xlu0 %v152, 120
    %v238 = vpop.permute.xlu0 %237
    %239 = vrot.lane.b32.xlu0 %v152, 88
    %v240 = vpop.permute.xlu0 %239
    %v241 = vsel %vm157, %v238, 0
    %v243 = vsel %vm157, %v240, 0
    %245 = vmatpush.xpose.msra.mxu0 0.0
    %246 = vmatpush.xpose.msra.mxu0 0.0
    %247 = vmatpush.xpose.msra.mxu0 0.0
    %248 = vmatpush.xpose.msra.mxu0 0.0
    %249 = vmatpush.xpose.msra.mxu0 0.0
    %250 = vmatpush.xpose.msra.mxu0 0.0
    %251 = vmatpush.xpose.msra.mxu0 0.0
    %252 = vmatpush.xpose.msra.mxu0 0.0
    %253 = vmatpush.xpose.msra.mxu0 0.0
    %254 = vmatpush.xpose.msra.mxu0 0.0
    %255 = vmatpush.xpose.msra.mxu0 0.0
    %256 = vmatpush.xpose.msra.mxu0 0.0
    %257 = vmatpush.xpose.msra.mxu0 0.0
    %258 = vmatpush.xpose.msra.mxu0 0.0
    %259 = vmatpush.xpose.msra.mxu0 0.0
    %260 = vmatpush.xpose.msra.mxu0 %v243
    %261 = vmatmul.f32.gmra.mxu0 %v241
    %v262 = vpop.f32.mrf.mxu0
    %v263 = vadd.f32 0.0, %v262
    %264 = vdwg.mxu0
    %265 = vrot.lane.b32.xlu0 %v149, 112
    %v266 = vpop.permute.xlu0 %265
    %267 = vrot.lane.b32.xlu0 %v149, 80
    %v268 = vpop.permute.xlu0 %267
    %v269 = vsel %vm157, %v266, 0
    %v271 = vsel %vm157, %v268, 0
    %273 = vmatpush.xpose.msra.mxu0 0.0
    %274 = vmatpush.xpose.msra.mxu0 0.0
    %275 = vmatpush.xpose.msra.mxu0 0.0
    %276 = vmatpush.xpose.msra.mxu0 0.0
    %277 = vmatpush.xpose.msra.mxu0 0.0
    %278 = vmatpush.xpose.msra.mxu0 0.0
    %279 = vmatpush.xpose.msra.mxu0 0.0
    %280 = vmatpush.xpose.msra.mxu0 0.0
    %281 = vmatpush.xpose.msra.mxu0 0.0
    %282 = vmatpush.xpose.msra.mxu0 0.0
    %283 = vmatpush.xpose.msra.mxu0 0.0
    %284 = vmatpush.xpose.msra.mxu0 0.0
    %285 = vmatpush.xpose.msra.mxu0 0.0
    %286 = vmatpush.xpose.msra.mxu0 0.0
    %287 = vmatpush.xpose.msra.mxu0 0.0
    %288 = vmatpush.xpose.msra.mxu0 %v271
    %289 = vmatmul.f32.gmra.mxu0 %v269
    %v290 = vpop.f32.mrf.mxu0
    %v291 = vadd.f32 0.0, %v290
    %292 = vdwg.mxu0
    %293 = vrot.lane.b32.xlu0 %v152, 112
    %v294 = vpop.permute.xlu0 %293
    %295 = vrot.lane.b32.xlu0 %v152, 80
    %v296 = vpop.permute.xlu0 %295
    %v297 = vsel %vm157, %v294, 0
    %v299 = vsel %vm157, %v296, 0
    %301 = vmatpush.xpose.msra.mxu0 0.0
    %302 = vmatpush.xpose.msra.mxu0 0.0
    %303 = vmatpush.xpose.msra.mxu0 0.0
    %304 = vmatpush.xpose.msra.mxu0 0.0
    %305 = vmatpush.xpose.msra.mxu0 0.0
    %306 = vmatpush.xpose.msra.mxu0 0.0
    %307 = vmatpush.xpose.msra.mxu0 0.0
    %308 = vmatpush.xpose.msra.mxu0 0.0
    %309 = vmatpush.xpose.msra.mxu0 0.0
    %310 = vmatpush.xpose.msra.mxu0 0.0
    %311 = vmatpush.xpose.msra.mxu0 0.0
    %312 = vmatpush.xpose.msra.mxu0 0.0
    %313 = vmatpush.xpose.msra.mxu0 0.0
    %314 = vmatpush.xpose.msra.mxu0 0.0
    %315 = vmatpush.xpose.msra.mxu0 0.0
    %316 = vmatpush.xpose.msra.mxu0 %v299
    %317 = vmatmul.f32.gmra.mxu0 %v297
    %v318 = vpop.f32.mrf.mxu0
    %v319 = vadd.f32 0.0, %v318
    %320 = vdwg.mxu0
    %321 = vrot.lane.b32.xlu0 %v149, 104
    %v322 = vpop.permute.xlu0 %321
    %323 = vrot.lane.b32.xlu0 %v149, 72
    %v324 = vpop.permute.xlu0 %323
    %v325 = vsel %vm157, %v322, 0
    %v327 = vsel %vm157, %v324, 0
    %329 = vmatpush.xpose.msra.mxu0 0.0
    %330 = vmatpush.xpose.msra.mxu0 0.0
    %331 = vmatpush.xpose.msra.mxu0 0.0
    %332 = vmatpush.xpose.msra.mxu0 0.0
    %333 = vmatpush.xpose.msra.mxu0 0.0
    %334 = vmatpush.xpose.msra.mxu0 0.0
    %335 = vmatpush.xpose.msra.mxu0 0.0
    %336 = vmatpush.xpose.msra.mxu0 0.0
    %337 = vmatpush.xpose.msra.mxu0 0.0
    %338 = vmatpush.xpose.msra.mxu0 0.0
    %339 = vmatpush.xpose.msra.mxu0 0.0
    %340 = vmatpush.xpose.msra.mxu0 0.0
    %341 = vmatpush.xpose.msra.mxu0 0.0
    %342 = vmatpush.xpose.msra.mxu0 0.0
    %343 = vmatpush.xpose.msra.mxu0 0.0
    %344 = vmatpush.xpose.msra.mxu0 %v327
    %345 = vmatmul.f32.gmra.mxu0 %v325
    %v346 = vpop.f32.mrf.mxu0
    %v347 = vadd.f32 0.0, %v346
    %348 = vdwg.mxu0
    %349 = vrot.lane.b32.xlu0 %v152, 104
    %v350 = vpop.permute.xlu0 %349
    %351 = vrot.lane.b32.xlu0 %v152, 72
    %v352 = vpop.permute.xlu0 %351
    %v353 = vsel %vm157, %v350, 0
    %v355 = vsel %vm157, %v352, 0
    %357 = vmatpush.xpose.msra.mxu0 0.0
    %358 = vmatpush.xpose.msra.mxu0 0.0
    %359 = vmatpush.xpose.msra.mxu0 0.0
    %360 = vmatpush.xpose.msra.mxu0 0.0
    %361 = vmatpush.xpose.msra.mxu0 0.0
    %362 = vmatpush.xpose.msra.mxu0 0.0
    %363 = vmatpush.xpose.msra.mxu0 0.0
    %364 = vmatpush.xpose.msra.mxu0 0.0
    %365 = vmatpush.xpose.msra.mxu0 0.0
    %366 = vmatpush.xpose.msra.mxu0 0.0
    %367 = vmatpush.xpose.msra.mxu0 0.0
    %368 = vmatpush.xpose.msra.mxu0 0.0
    %369 = vmatpush.xpose.msra.mxu0 0.0
    %370 = vmatpush.xpose.msra.mxu0 0.0
    %371 = vmatpush.xpose.msra.mxu0 0.0
    %372 = vmatpush.xpose.msra.mxu0 %v355
    %373 = vmatmul.f32.gmra.mxu0 %v353
    %v374 = vpop.f32.mrf.mxu0
    %v375 = vadd.f32 0.0, %v374
    %376 = vdwg.mxu0
    %v377 = vmul.f32 %v180, 0.35355338
    %v378 = vmul.f32 %v235, 0.35355338
    %v379 = vmul.f32 %v291, 0.35355338
    %v380 = vmul.f32 %v347, 0.35355338
    %v381 = vmul.f32 %v207, 0.35355338
    %v382 = vmul.f32 %v263, 0.35355338
    %v383 = vmul.f32 %v319, 0.35355338
    %v384 = vmul.f32 %v375, 0.35355338
    %v385 = vsel %vm157, %v377, -inf
    %386 = vmax.xlane.f32.xlu0 %v385
    %v387 = vpop.xlane.xlu0 %386
    %v388 = vsel %vm157, %v378, -inf
    %389 = vmax.xlane.f32.xlu0 %v388
    %v390 = vpop.xlane.xlu0 %389
    %v391 = vsel %vm157, %v379, -inf
    %392 = vmax.xlane.f32.xlu0 %v391
    %v393 = vpop.xlane.xlu0 %392
    %v394 = vsel %vm157, %v380, -inf
    %395 = vmax.xlane.f32.xlu0 %v394
    %v396 = vpop.xlane.xlu0 %395
    %v397 = vsel %vm157, %v381, -inf
    %398 = vmax.xlane.f32.xlu0 %v397
    %v399 = vpop.xlane.xlu0 %398
    %v400 = vsel %vm157, %v382, -inf
    %401 = vmax.xlane.f32.xlu0 %v400
    %v402 = vpop.xlane.xlu0 %401
    %v403 = vsel %vm157, %v383, -inf
    %404 = vmax.xlane.f32.xlu0 %v403
    %v405 = vpop.xlane.xlu0 %404
    %v406 = vsel %vm157, %v384, -inf
    %407 = vmax.xlane.f32.xlu0 %v406
    %v408 = vpop.xlane.xlu0 %407
    %v409 = vsub.f32 %v377, %v387
    %v410 = vsub.f32 %v378, %v390
    %v411 = vsub.f32 %v379, %v393
    %v412 = vsub.f32 %v380, %v396
    %v413 = vsub.f32 %v381, %v399
    %v414 = vsub.f32 %v382, %v402
    %v415 = vsub.f32 %v383, %v405
    %v416 = vsub.f32 %v384, %v408
    %v417 = vmul.f32 %v409, 1.442695
    %v418 = vpow.pop %v417
    %v419 = vmul.f32 %v410, 1.442695
    %v420 = vpow.pop %v419
    %v421 = vmul.f32 %v411, 1.442695
    %v422 = vpow.pop %v421
    %v423 = vmul.f32 %v412, 1.442695
    %v424 = vpow.pop %v423
    %v425 = vmul.f32 %v413, 1.442695
    %v426 = vpow.pop %v425
    %v427 = vmul.f32 %v414, 1.442695
    %v428 = vpow.pop %v427
    %v429 = vmul.f32 %v415, 1.442695
    %v430 = vpow.pop %v429
    %v431 = vmul.f32 %v416, 1.442695
    %v432 = vpow.pop %v431
    %v433 = vsel %vm157, %v418, 0.0
    %434 = vadd.xlane.f32.xlu0 %v433
    %v435 = vpop.xlane.xlu0 %434
    %v436 = vsel %vm157, %v420, 0.0
    %437 = vadd.xlane.f32.xlu0 %v436
    %v438 = vpop.xlane.xlu0 %437
    %v439 = vsel %vm157, %v422, 0.0
    %440 = vadd.xlane.f32.xlu0 %v439
    %v441 = vpop.xlane.xlu0 %440
    %v442 = vsel %vm157, %v424, 0.0
    %443 = vadd.xlane.f32.xlu0 %v442
    %v444 = vpop.xlane.xlu0 %443
    %v445 = vsel %vm157, %v426, 0.0
    %446 = vadd.xlane.f32.xlu0 %v445
    %v447 = vpop.xlane.xlu0 %446
    %v448 = vsel %vm157, %v428, 0.0
    %449 = vadd.xlane.f32.xlu0 %v448
    %v450 = vpop.xlane.xlu0 %449
    %v451 = vsel %vm157, %v430, 0.0
    %452 = vadd.xlane.f32.xlu0 %v451
    %v453 = vpop.xlane.xlu0 %452
    %v454 = vsel %vm157, %v432, 0.0
    %455 = vadd.xlane.f32.xlu0 %v454
    %v456 = vpop.xlane.xlu0 %455
    %v457 = vrcp.pop %v435
    %v458 = vrcp.pop %v438
    %v459 = vrcp.pop %v441
    %v460 = vrcp.pop %v444
    %v461 = vrcp.pop %v447
    %v462 = vrcp.pop %v450
    %v463 = vrcp.pop %v453
    %v464 = vrcp.pop %v456
    %v465 = vmul.f32 %v418, %v457
    %v466 = vmul.f32 %v420, %v458
    %v467 = vmul.f32 %v422, %v459
    %v468 = vmul.f32 %v424, %v460
    %v469 = vmul.f32 %v426, %v461
    %v470 = vmul.f32 %v428, %v462
    %v471 = vmul.f32 %v430, %v463
    %v472 = vmul.f32 %v432, %v464
    %473 = vrot.lane.b32.xlu0 %v149, 64
    %v474 = vpop.permute.xlu0 %473
    %v477 = vsel %vm157, %v465, 0
    %479 = vmatpush.msra.mxu0 0.0
    %480 = vmatpush.msra.mxu0 0.0
    %481 = vmatpush.msra.mxu0 0.0
    %482 = vmatpush.msra.mxu0 0.0
    %483 = vmatpush.msra.mxu0 0.0
    %484 = vmatpush.msra.mxu0 0.0
    %485 = vmatpush.msra.mxu0 0.0
    %486 = vmatpush.msra.mxu0 0.0
    %487 = vmatpush.msra.mxu0 0.0
    %488 = vmatpush.msra.mxu0 0.0
    %489 = vmatpush.msra.mxu0 0.0
    %490 = vmatpush.msra.mxu0 0.0
    %491 = vmatpush.msra.mxu0 0.0
    %492 = vmatpush.msra.mxu0 0.0
    %493 = vmatpush.msra.mxu0 0.0
    %494 = vmatpush.msra.mxu0 %v474
    %495 = vmatmul.f32.gmra.mxu0 %v477
    %v496 = vpop.f32.mrf.mxu0
    %v497 = vadd.f32 0.0, %v496
    %498 = vdwg.mxu0
    %499 = vrot.lane.b32.xlu0 %v152, 64
    %v500 = vpop.permute.xlu0 %499
    %v503 = vsel %vm157, %v469, 0
    %505 = vmatpush.msra.mxu0 0.0
    %506 = vmatpush.msra.mxu0 0.0
    %507 = vmatpush.msra.mxu0 0.0
    %508 = vmatpush.msra.mxu0 0.0
    %509 = vmatpush.msra.mxu0 0.0
    %510 = vmatpush.msra.mxu0 0.0
    %511 = vmatpush.msra.mxu0 0.0
    %512 = vmatpush.msra.mxu0 0.0
    %513 = vmatpush.msra.mxu0 0.0
    %514 = vmatpush.msra.mxu0 0.0
    %515 = vmatpush.msra.mxu0 0.0
    %516 = vmatpush.msra.mxu0 0.0
    %517 = vmatpush.msra.mxu0 0.0
    %518 = vmatpush.msra.mxu0 0.0
    %519 = vmatpush.msra.mxu0 0.0
    %520 = vmatpush.msra.mxu0 %v500
    %521 = vmatmul.f32.gmra.mxu0 %v503
    %v522 = vpop.f32.mrf.mxu0
    %v523 = vadd.f32 0.0, %v522
    %524 = vdwg.mxu0
    %525 = vrot.lane.b32.xlu0 %v149, 56
    %v526 = vpop.permute.xlu0 %525
    %v529 = vsel %vm157, %v466, 0
    %531 = vmatpush.msra.mxu0 0.0
    %532 = vmatpush.msra.mxu0 0.0
    %533 = vmatpush.msra.mxu0 0.0
    %534 = vmatpush.msra.mxu0 0.0
    %535 = vmatpush.msra.mxu0 0.0
    %536 = vmatpush.msra.mxu0 0.0
    %537 = vmatpush.msra.mxu0 0.0
    %538 = vmatpush.msra.mxu0 0.0
    %539 = vmatpush.msra.mxu0 0.0
    %540 = vmatpush.msra.mxu0 0.0
    %541 = vmatpush.msra.mxu0 0.0
    %542 = vmatpush.msra.mxu0 0.0
    %543 = vmatpush.msra.mxu0 0.0
    %544 = vmatpush.msra.mxu0 0.0
    %545 = vmatpush.msra.mxu0 0.0
    %546 = vmatpush.msra.mxu0 %v526
    %547 = vmatmul.f32.gmra.mxu0 %v529
    %v548 = vpop.f32.mrf.mxu0
    %v549 = vadd.f32 0.0, %v548
    %550 = vdwg.mxu0
    %551 = vrot.lane.b32.xlu0 %v152, 56
    %v552 = vpop.permute.xlu0 %551
    %v555 = vsel %vm157, %v470, 0
    %557 = vmatpush.msra.mxu0 0.0
    %558 = vmatpush.msra.mxu0 0.0
    %559 = vmatpush.msra.mxu0 0.0
    %560 = vmatpush.msra.mxu0 0.0
    %561 = vmatpush.msra.mxu0 0.0
    %562 = vmatpush.msra.mxu0 0.0
    %563 = vmatpush.msra.mxu0 0.0
    %564 = vmatpush.msra.mxu0 0.0
    %565 = vmatpush.msra.mxu0 0.0
    %566 = vmatpush.msra.mxu0 0.0
    %567 = vmatpush.msra.mxu0 0.0
    %568 = vmatpush.msra.mxu0 0.0
    %569 = vmatpush.msra.mxu0 0.0
    %570 = vmatpush.msra.mxu0 0.0
    %571 = vmatpush.msra.mxu0 0.0
    %572 = vmatpush.msra.mxu0 %v552
    %573 = vmatmul.f32.gmra.mxu0 %v555
    %v574 = vpop.f32.mrf.mxu0
    %v575 = vadd.f32 0.0, %v574
    %576 = vdwg.mxu0
    %577 = vrot.lane.b32.xlu0 %v149, 48
    %v578 = vpop.permute.xlu0 %577
    %v581 = vsel %vm157, %v467, 0
    %583 = vmatpush.msra.mxu0 0.0
    %584 = vmatpush.msra.mxu0 0.0
    %585 = vmatpush.msra.mxu0 0.0
    %586 = vmatpush.msra.mxu0 0.0
    %587 = vmatpush.msra.mxu0 0.0
    %588 = vmatpush.msra.mxu0 0.0
    %589 = vmatpush.msra.mxu0 0.0
    %590 = vmatpush.msra.mxu0 0.0
    %591 = vmatpush.msra.mxu0 0.0
    %592 = vmatpush.msra.mxu0 0.0
    %593 = vmatpush.msra.mxu0 0.0
    %594 = vmatpush.msra.mxu0 0.0
    %595 = vmatpush.msra.mxu0 0.0
    %596 = vmatpush.msra.mxu0 0.0
    %597 = vmatpush.msra.mxu0 0.0
    %598 = vmatpush.msra.mxu0 %v578
    %599 = vmatmul.f32.gmra.mxu0 %v581
    %v600 = vpop.f32.mrf.mxu0
    %v601 = vadd.f32 0.0, %v600
    %602 = vdwg.mxu0
    %603 = vrot.lane.b32.xlu0 %v152, 48
    %v604 = vpop.permute.xlu0 %603
    %v607 = vsel %vm157, %v471, 0
    %609 = vmatpush.msra.mxu0 0.0
    %610 = vmatpush.msra.mxu0 0.0
    %611 = vmatpush.msra.mxu0 0.0
    %612 = vmatpush.msra.mxu0 0.0
    %613 = vmatpush.msra.mxu0 0.0
    %614 = vmatpush.msra.mxu0 0.0
    %615 = vmatpush.msra.mxu0 0.0
    %616 = vmatpush.msra.mxu0 0.0
    %617 = vmatpush.msra.mxu0 0.0
    %618 = vmatpush.msra.mxu0 0.0
    %619 = vmatpush.msra.mxu0 0.0
    %620 = vmatpush.msra.mxu0 0.0
    %621 = vmatpush.msra.mxu0 0.0
    %622 = vmatpush.msra.mxu0 0.0
    %623 = vmatpush.msra.mxu0 0.0
    %624 = vmatpush.msra.mxu0 %v604
    %625 = vmatmul.f32.gmra.mxu0 %v607
    %v626 = vpop.f32.mrf.mxu0
    %v627 = vadd.f32 0.0, %v626
    %628 = vdwg.mxu0
    %629 = vrot.lane.b32.xlu0 %v149, 40
    %v630 = vpop.permute.xlu0 %629
    %v633 = vsel %vm157, %v468, 0
    %635 = vmatpush.msra.mxu0 0.0
    %636 = vmatpush.msra.mxu0 0.0
    %637 = vmatpush.msra.mxu0 0.0
    %638 = vmatpush.msra.mxu0 0.0
    %639 = vmatpush.msra.mxu0 0.0
    %640 = vmatpush.msra.mxu0 0.0
    %641 = vmatpush.msra.mxu0 0.0
    %642 = vmatpush.msra.mxu0 0.0
    %643 = vmatpush.msra.mxu0 0.0
    %644 = vmatpush.msra.mxu0 0.0
    %645 = vmatpush.msra.mxu0 0.0
    %646 = vmatpush.msra.mxu0 0.0
    %647 = vmatpush.msra.mxu0 0.0
    %648 = vmatpush.msra.mxu0 0.0
    %649 = vmatpush.msra.mxu0 0.0
    %650 = vmatpush.msra.mxu0 %v630
    %651 = vmatmul.f32.gmra.mxu0 %v633
    %v652 = vpop.f32.mrf.mxu0
    %v653 = vadd.f32 0.0, %v652
    %654 = vdwg.mxu0
    %655 = vrot.lane.b32.xlu0 %v152, 40
    %v656 = vpop.permute.xlu0 %655
    %v659 = vsel %vm157, %v472, 0
    %661 = vmatpush.msra.mxu0 0.0
    %662 = vmatpush.msra.mxu0 0.0
    %663 = vmatpush.msra.mxu0 0.0
    %664 = vmatpush.msra.mxu0 0.0
    %665 = vmatpush.msra.mxu0 0.0
    %666 = vmatpush.msra.mxu0 0.0
    %667 = vmatpush.msra.mxu0 0.0
    %668 = vmatpush.msra.mxu0 0.0
    %669 = vmatpush.msra.mxu0 0.0
    %670 = vmatpush.msra.mxu0 0.0
    %671 = vmatpush.msra.mxu0 0.0
    %672 = vmatpush.msra.mxu0 0.0
    %673 = vmatpush.msra.mxu0 0.0
    %674 = vmatpush.msra.mxu0 0.0
    %675 = vmatpush.msra.mxu0 0.0
    %676 = vmatpush.msra.mxu0 %v656
    %677 = vmatmul.f32.gmra.mxu0 %v659
    %v678 = vpop.f32.mrf.mxu0
    %v679 = vadd.f32 0.0, %v678
    %680 = vdwg.mxu0
    %683 = vrot.lane.b32.xlu0 %v549, 8
    %v684 = vpop.permute.xlu0 %683
    %685 = vrot.lane.b32.xlu0 %v575, 8
    %v686 = vpop.permute.xlu0 %685
    %691 = vrot.lane.b32.xlu0 %v601, 16
    %v692 = vpop.permute.xlu0 %691
    %693 = vrot.lane.b32.xlu0 %v627, 16
    %v694 = vpop.permute.xlu0 %693
    %699 = vrot.lane.b32.xlu0 %v653, 24
    %v700 = vpop.permute.xlu0 %699
    %701 = vrot.lane.b32.xlu0 %v679, 24
    %v702 = vpop.permute.xlu0 %701
    %v705 = vsel %vm157, %v497, %v684
    %v706 = vsel %vm157, %v523, %v686
    %vm707 = vcmask 130048
    %v708 = vsel %vm707, %v705, %v692
    %v709 = vsel %vm707, %v706, %v694
    %vm710 = vcmask 195584
    %v711 = vsel %vm710, %v708, %v700
    %v712 = vsel %vm710, %v709, %v702
    %v713 = vld [vmem:[%s6] sm:$0xff]
    %v714 = vld [vmem:[%s6 + $0x8] sm:$0xff]
    %v715 = vld [vmem:[%s6 + $0x10] sm:$0xff]
    %v716 = vld [vmem:[%s6 + $0x18] sm:$0xff]
    %v717 = vld [vmem:[%s7] sm:$0x1]
    %v719 = vperm.slane %v717, 0
    %v722 = vsel %vm124, %v711, 0
    %v725 = vsel %vm124, %v712, 0
    %727 = vmatpush.msra.mxu0 0.0
    %728 = vmatpush.msra.mxu0 0.0
    %729 = vmatpush.msra.mxu0 0.0
    %730 = vmatpush.msra.mxu0 0.0
    %731 = vmatpush.msra.mxu0 0.0
    %732 = vmatpush.msra.mxu0 0.0
    %733 = vmatpush.msra.mxu0 0.0
    %734 = vmatpush.msra.mxu0 0.0
    %735 = vmatpush.msra.mxu0 0.0
    %736 = vmatpush.msra.mxu0 0.0
    %737 = vmatpush.msra.mxu0 0.0
    %738 = vmatpush.msra.mxu0 0.0
    %739 = vmatpush.msra.mxu0 %v716
    %740 = vmatpush.msra.mxu0 %v715
    %741 = vmatpush.msra.mxu0 %v714
    %742 = vmatpush.msra.mxu0 %v713
    %743 = vmatmul.f32.gmra.mxu0 %v722
    %v744 = vpop.f32.mrf.mxu0
    %v745 = vadd.f32 %v719, %v744
    %746 = vmatmul.f32.gmra.mxu0 %v725
    %v747 = vpop.f32.mrf.mxu0
    %v748 = vadd.f32 %v719, %v747
    %749 = vdwg.mxu0
    %v750 = vadd.f32 %v111, %v745
    %v751 = vadd.f32 %v114, %v748
    %v752 = vsel %vm124, %v750, 0.0
    %753 = vadd.xlane.f32.xlu0 %v752
    %v754 = vpop.xlane.xlu0 %753
    %v755 = vsel %vm124, %v751, 0.0
    %756 = vadd.xlane.f32.xlu0 %v755
    %v757 = vpop.xlane.xlu0 %756
    %v758 = vrcp.pop 32.0
    %v759 = vmul.f32 32.0, %v758
    %v760 = vsub.f32 1.0, %v759
    %v761 = vmul.f32 %v758, %v760
    %v762 = vadd.f32 %v758, %v761
    %vm763 = vweird.f32 %v758
    %v764 = vsel %vm763, %v758, %v762
    %v765 = vmul.f32 %v754, %v764
    %v766 = vmul.f32 %v757, %v764
    %v767 = vsub.f32 %v750, %v765
    %v768 = vsub.f32 %v751, %v766
    %v769 = vmul.f32 %v767, %v767
    %v770 = vmul.f32 %v768, %v768
    %v771 = vsel %vm124, %v769, 0.0
    %772 = vadd.xlane.f32.xlu0 %v771
    %v773 = vpop.xlane.xlu0 %772
    %v774 = vsel %vm124, %v770, 0.0
    %775 = vadd.xlane.f32.xlu0 %v774
    %v776 = vpop.xlane.xlu0 %775
    %v777 = vmul.f32 %v773, %v764
    %v778 = vmul.f32 %v776, %v764
    %v779 = vadd.f32 %v777, 1e-05
    %v780 = vadd.f32 %v778, 1e-05
    %v781 = vrsqrt.pop %v779
    %v782 = vmul.f32 %v781, %v779
    %v783 = vmul.f32 %v782, %v781
    %v784 = vmul.f32 0.5, %v783
    %v785 = vsub.f32 1.5, %v784
    %v786 = vmul.f32 %v781, %v785
    %vm787 = vweird.f32 %v779
    %vm788 = vweird.f32 %v781
    %vm789 = vmor %vm787, %vm788
    %v790 = vsel %vm789, %v781, %v786
    %v791 = vrsqrt.pop %v780
    %v792 = vmul.f32 %v791, %v780
    %v793 = vmul.f32 %v792, %v791
    %v794 = vmul.f32 0.5, %v793
    %v795 = vsub.f32 1.5, %v794
    %v796 = vmul.f32 %v791, %v795
    %vm797 = vweird.f32 %v780
    %vm798 = vweird.f32 %v791
    %vm799 = vmor %vm797, %vm798
    %v800 = vsel %vm799, %v791, %v796
    %v801 = vmul.f32 %v767, %v790
    %v802 = vmul.f32 %v768, %v800
    %v803 = vld [vmem:[%s8] sm:$0x1]
    %v805 = vperm.slane %v803, 0
    %v807 = vmul.f32 %v801, %v805
    %v808 = vmul.f32 %v802, %v805
    %v809 = vld [vmem:[%s9] sm:$0x1]
    %v811 = vperm.slane %v809, 0
    %v813 = vadd.f32 %v807, %v811
    %v814 = vadd.f32 %v808, %v811
    %v815 = vld [vmem:[%s10] sm:$0xff]
    %v816 = vld [vmem:[%s10 + $0x8] sm:$0xff]
    %v817 = vld [vmem:[%s10 + $0x10] sm:$0xff]
    %v818 = vld [vmem:[%s10 + $0x18] sm:$0xff]
    %v819 = vld [vmem:[%s11] sm:$0x1]
    %v821 = vperm.slane %v819, 0
    %v824 = vsel %vm124, %v813, 0
    %v827 = vsel %vm124, %v814, 0
    %829 = vmatpush.msra.mxu0 0.0
    %830 = vmatpush.msra.mxu0 0.0
    %831 = vmatpush.msra.mxu0 0.0
    %832 = vmatpush.msra.mxu0 0.0
    %833 = vmatpush.msra.mxu0 0.0
    %834 = vmatpush.msra.mxu0 0.0
    %835 = vmatpush.msra.mxu0 0.0
    %836 = vmatpush.msra.mxu0 0.0
    %837 = vmatpush.msra.mxu0 0.0
    %838 = vmatpush.msra.mxu0 0.0
    %839 = vmatpush.msra.mxu0 0.0
    %840 = vmatpush.msra.mxu0 0.0
    %841 = vmatpush.msra.mxu0 %v818
    %842 = vmatpush.msra.mxu0 %v817
    %843 = vmatpush.msra.mxu0 %v816
    %844 = vmatpush.msra.mxu0 %v815
    %845 = vmatmul.f32.gmra.mxu0 %v824
    %v846 = vpop.f32.mrf.mxu0
    %v847 = vadd.f32 %v821, %v846
    %848 = vmatmul.f32.gmra.mxu0 %v827
    %v849 = vpop.f32.mrf.mxu0
    %v850 = vadd.f32 %v821, %v849
    %851 = vdwg.mxu0
    %v852 = vmax.f32 %v847, 0.0
    %v853 = vmax.f32 %v850, 0.0
    %v854 = vld [vmem:[%s12] sm:$0xff]
    %v855 = vld [vmem:[%s12 + $0x8] sm:$0xff]
    %v856 = vld [vmem:[%s12 + $0x10] sm:$0xff]
    %v857 = vld [vmem:[%s12 + $0x18] sm:$0xff]
    %v858 = vld [vmem:[%s12 + $0x20] sm:$0xff]
    %v859 = vld [vmem:[%s12 + $0x28] sm:$0xff]
    %v860 = vld [vmem:[%s12 + $0x30] sm:$0xff]
    %v861 = vld [vmem:[%s12 + $0x38] sm:$0xff]
    %v862 = vld [vmem:[%s13] sm:$0x1]
    %v864 = vperm.slane %v862, 0
    %v867 = vsel %vm86, %v852, 0
    %v870 = vsel %vm86, %v853, 0
    %872 = vmatpush.msra.mxu0 0.0
    %873 = vmatpush.msra.mxu0 0.0
    %874 = vmatpush.msra.mxu0 0.0
    %875 = vmatpush.msra.mxu0 0.0
    %876 = vmatpush.msra.mxu0 0.0
    %877 = vmatpush.msra.mxu0 0.0
    %878 = vmatpush.msra.mxu0 0.0
    %879 = vmatpush.msra.mxu0 0.0
    %880 = vmatpush.msra.mxu0 %v861
    %881 = vmatpush.msra.mxu0 %v860
    %882 = vmatpush.msra.mxu0 %v859
    %883 = vmatpush.msra.mxu0 %v858
    %884 = vmatpush.msra.mxu0 %v857
    %885 = vmatpush.msra.mxu0 %v856
    %886 = vmatpush.msra.mxu0 %v855
    %887 = vmatpush.msra.mxu0 %v854
    %888 = vmatmul.f32.gmra.mxu0 %v867
    %v889 = vpop.f32.mrf.mxu0
    %v890 = vadd.f32 %v864, %v889
    %891 = vmatmul.f32.gmra.mxu0 %v870
    %v892 = vpop.f32.mrf.mxu0
    %v893 = vadd.f32 %v864, %v892
    %894 = vdwg.mxu0
    %v895 = vadd.f32 %v813, %v890
    %v896 = vadd.f32 %v814, %v893
    %v897 = vsel %vm124, %v895, 0.0
    %898 = vadd.xlane.f32.xlu0 %v897
    %v899 = vpop.xlane.xlu0 %898
    %v900 = vsel %vm124, %v896, 0.0
    %901 = vadd.xlane.f32.xlu0 %v900
    %v902 = vpop.xlane.xlu0 %901
    %v903 = vmul.f32 %v899, %v764
    %v904 = vmul.f32 %v902, %v764
    %v905 = vsub.f32 %v895, %v903
    %v906 = vsub.f32 %v896, %v904
    %v907 = vmul.f32 %v905, %v905
    %v908 = vmul.f32 %v906, %v906
    %v909 = vsel %vm124, %v907, 0.0
    %910 = vadd.xlane.f32.xlu0 %v909
    %v911 = vpop.xlane.xlu0 %910
    %v912 = vsel %vm124, %v908, 0.0
    %913 = vadd.xlane.f32.xlu0 %v912
    %v914 = vpop.xlane.xlu0 %913
    %v915 = vmul.f32 %v911, %v764
    %v916 = vmul.f32 %v914, %v764
    %v917 = vadd.f32 %v915, 1e-05
    %v918 = vadd.f32 %v916, 1e-05
    %v919 = vrsqrt.pop %v917
    %v920 = vmul.f32 %v919, %v917
    %v921 = vmul.f32 %v920, %v919
    %v922 = vmul.f32 0.5, %v921
    %v923 = vsub.f32 1.5, %v922
    %v924 = vmul.f32 %v919, %v923
    %vm925 = vweird.f32 %v917
    %vm926 = vweird.f32 %v919
    %vm927 = vmor %vm925, %vm926
    %v928 = vsel %vm927, %v919, %v924
    %v929 = vrsqrt.pop %v918
    %v930 = vmul.f32 %v929, %v918
    %v931 = vmul.f32 %v930, %v929
    %v932 = vmul.f32 0.5, %v931
    %v933 = vsub.f32 1.5, %v932
    %v934 = vmul.f32 %v929, %v933
    %vm935 = vweird.f32 %v918
    %vm936 = vweird.f32 %v929
    %vm937 = vmor %vm935, %vm936
    %v938 = vsel %vm937, %v929, %v934
    %v939 = vmul.f32 %v905, %v928
    %v940 = vmul.f32 %v906, %v938
    %v941 = vld [vmem:[%s14] sm:$0x1]
    %v943 = vperm.slane %v941, 0
    %v945 = vmul.f32 %v939, %v943
    %v946 = vmul.f32 %v940, %v943
    %v947 = vld [vmem:[%s15] sm:$0x1]
    %v949 = vperm.slane %v947, 0
    %v951 = vadd.f32 %v945, %v949
    %v952 = vadd.f32 %v946, %v949
    %953 = vst.msk [vmem:[#allocation2] sm:$0xff] %vm124, %v951
    %954 = vst.msk [vmem:[#allocation2 + $0x8] sm:$0xff] %vm124, %v952
    %s955 = sld [smem:[#allocation4]]
    %s956 = ssub.s32 %s955, 1
    %p957 = scmp.gt.s32.totalorder %s956, 0
    %s958 = scalar_select %p957, %s956, 0
    %s959 = scalar_lea.vmem [#allocation2], %s958
    %v960 = vld [vmem:[%s959] sm:$0x1]
    %s961 = sld [smem:[#allocation4 + $0x1]]
    %s962 = ssub.s32 %s961, 1
    %p963 = scmp.gt.s32.totalorder %s962, 0
    %s964 = scalar_select %p963, %s962, 0
    %s965 = sadd.s32 %s964, 8
    %s966 = scalar_lea.vmem [#allocation2], %s965
    %v967 = vld [vmem:[%s966] sm:$0x1]
    %v969 = vrot.slane %v967, 7
    %vm971 = vcmask 1040384
    %v972 = vsel %vm971, %v960, %v969
    %vm973 = vcmask 254976
    %974 = vst.msk [vmem:[#allocation5] sm:$0x3] %vm973, %v972
    // Predicated region
    $region62: #{transformer_encoder_forward.1} parent=1 // pred_check
      _
    $region63: #{transformer_encoder_forward.1} parent=1 // pred_check_branch
      %976 = sbr.rel (0) target = $region65
    $region64: #{transformer_encoder_forward.1} parent=1 // pred_region
      %978 = vsyncadd [#allocation6], 0
      %s980 = sshll.u32 [#allocation5], 4
      %s981 = int_to_ptr.vmem [resolvable:$true] %s980
      %s982 = sshll.u32 %s16, 4
      %s983 = int_to_ptr.hbm [resolvable:$true] %s982
      %985 = dma.vmem_to_hbm [thread:$0]  %s981, 32, %s983, [#allocation6]
    $region65: #{transformer_encoder_forward.1} parent=1 // pred_fallthru
      _
    // Predicated region
    $region66: #{transformer_encoder_forward.1} parent=1 // pred_check
      _
    $region67: #{transformer_encoder_forward.1} parent=1 // pred_check_branch
      %987 = sbr.rel (0) target = $region69
    $region68: #{transformer_encoder_forward.1} parent=1 // pred_region
      %989 = dma.done [#allocation6], 32
    $region69: #{transformer_encoder_forward.1} parent=1 // pred_fallthru
      _
    %990 = vsyncpa [#allocation6], 1

</llo_original>
